<compile_context>
chip_gen: v6e
topology: v6e:2x2x1
jax: 0.10.0
libtpu: 0.0.40
codegen_flags: <defaults>
</compile_context>

<pallas_src>
import functools
import math

import jax
import jax.numpy as jnp
from jax import lax
from jax.experimental import pallas as pl
from jax.experimental.pallas import tpu as pltpu


# ------------------------------ Pallas kernel -------------------------------

def _inception_resnet_a_kernel(
    x_ref,       # (M, C)    flattened (batch_tile * L, C) activation block, f32
    w_in_ref,    # (C, C)    fused 1x1 weights [conv1_1 | conv2_1 | conv3_1], bf16
    w_stk_ref,   # (9, C, C) 3 stages x 3 taps of packed (block-diag) weights, bf16
    b_ref,       # (4, C)    per-stage biases, f32
    o_ref,       # (M, C)
    *,
    seq_len,         # L (static): rows per sample inside the flattened block
    compute_dtype,   # matmul operand dtype (bf16 by default, f32 supported)
):
    x = x_ref[...].astype(jnp.float32)
    M, C = x.shape
    cd = compute_dtype

    def mm(a, b):
        # MXU matmul: operands in compute_dtype, accumulation in f32.
        return jnp.dot(a.astype(cd), b.astype(cd),
                       preferred_element_type=jnp.float32)

    relu = lambda t: jnp.maximum(t, 0.0)

    # Per-sample boundary masks, hoisted once and shared by the three 3-tap
    # stages (JAX does not CSE broadcast_in_dim).  Kept in f32/int32.
    row = lax.broadcasted_iota(jnp.int32, (M, 1), 0)
    pos = row % seq_len
    has_prev = pos >= 1                  # row i-1 belongs to the same sample
    has_next = pos < seq_len - 1         # row i+1 belongs to the same sample

    def tap3(t, stage):
        # 3-tap conv over the full C-wide slab as 3 accumulating matmuls:
        #   y = prev @ W[0] + cur @ W[1] + next @ W[2]
        # The branch structure (which input block feeds which output block,
        # plus identity passthrough of already-finished branches) lives in the
        # packed weights, so no lane concats / slices are ever needed.
        # pltpu.roll needs non-negative shifts: roll by M-1 == roll by -1.
        tp = jnp.where(has_prev, pltpu.roll(t, shift=1, axis=0), 0.0)
        tn = jnp.where(has_next, pltpu.roll(t, shift=M - 1, axis=0), 0.0)
        base = 3 * stage
        return (mm(tp, w_stk_ref[base])
                + mm(t, w_stk_ref[base + 1])
                + mm(tn, w_stk_ref[base + 2]))

    # Stage 0: the three 1x1 convs fused into one (M, C) @ (C, C) matmul.
    h = relu(mm(x, w_in_ref[...]) + b_ref[0:1, :])        # lanes = [b1 | b2 | b3]
    # Stage 1: conv2_2 & conv3_2 fused (block-diag); b1 passes through identity.
    h = relu(tap3(h, 0) + b_ref[1:2, :])                  # [b1 | b2' | b3']
    # Stage 2: conv3_3; b1 and b2 pass through identity blocks.
    h = relu(tap3(h, 1) + b_ref[2:3, :])                  # [b1 | b2' | b3'']
    # Stage 3: final linear 3-tap conv over the (implicit) concat, + residual.
    y = tap3(h, 2) + b_ref[3:4, :]
    o_ref[...] = relu(y + x).astype(o_ref.dtype)


# ------------------------------- weight packing ------------------------------

def pack_params(p, compute_dtype=jnp.bfloat16):
    """Pack the 16 folded per-layer tensors into 3 kernel arrays.

    w_stk[3*s + t] is the (C, C) weight of stage s (s=0: conv2_2/conv3_2,
    s=1: conv3_3, s=2: final conv) for tap t (0: x[i-1], 1: x[i], 2: x[i+1]).
    Zero blocks kill cross-branch terms; identity blocks carry already-finished
    branches forward so the final conv never needs an explicit lane concat.
    """
    C, H = p["w11"].shape
    z = jnp.zeros((H, H), jnp.float32)
    e = jnp.eye(H, dtype=jnp.float32)

    def bd(a, b, c):                       # block-diagonal (3H, 3H) = (C, C)
        return jnp.block([[a, z, z], [z, b, z], [z, z, c]])

    w22, w32, w33, wc = p["w22"], p["w32"], p["w33"], p["wc"]

    w_in = jnp.concatenate([p["w11"], p["w21"], p["w31"]], axis=1)          # (C, C)
    w_stk = jnp.stack([
        # stage 0: [b1 passthrough | conv2_2 | conv3_2]
        bd(z, w22[0], w32[0]), bd(e, w22[1], w32[1]), bd(z, w22[2], w32[2]),
        # stage 1: [b1 passthrough | b2 passthrough | conv3_3]
        bd(z, z, w33[0]),      bd(e, e, w33[1]),      bd(z, z, w33[2]),
        # stage 2: final conv over cat([b1, b2, b3]) — rows already branch-major
        wc[0], wc[1], wc[2],
    ])                                                                      # (9, C, C)

    zb = jnp.zeros((1, H), jnp.float32)
    b_all = jnp.concatenate([
        jnp.concatenate([p["b11"], p["b21"], p["b31"]], axis=1),
        jnp.concatenate([zb, p["b22"], p["b32"]], axis=1),
        jnp.concatenate([zb, zb, p["b33"]], axis=1),
        p["bc"],
    ], axis=0)                                                              # (4, C)

    return (w_in.astype(compute_dtype),
            w_stk.astype(compute_dtype),
            b_all.astype(jnp.float32))


# ------------------------------- block sizing --------------------------------

def _default_batch_tile(N, L, C, itemsize):
    """HBM-roofline block sizing:
       1) blocks of >= 512 rows (DMA efficiency),
       2) then >= 8 grid steps (pipelining overlap + both v7x TensorCores),
       3) then grow blocks up to ~4096 rows to amortize per-step overhead,
    while capping per-block activation bytes so double-buffered in/out plus
    intermediates stay well inside v7x's 32 MiB scoped VMEM."""
    block_budget = 2 << 20   # bytes per (M, C) activation block
    feasible = [bt for bt in range(1, N + 1)
                if N % bt == 0 and ((bt * L) % 8 == 0 or bt == N)]
    in_budget = [bt for bt in feasible if bt * L * C * itemsize <= block_budget]

    def score(bt):
        M, g = bt * L, N // bt
        return (min(M, 512), min(g, 8), min(M, 4096), g % 2 == 0, -g)

    if in_budget:
        return max(in_budget, key=score)
    # Even one sample per block blows the budget; take the smallest legal block.
    # TODO(synk): for huge L*C, tile L inside each block with a 1-row halo
    #             (overlapping index_map) instead of whole samples per block.
    return min(feasible, key=lambda bt: bt * L)


# --------------------------------- wrapper -----------------------------------

def inception_resnet_a(x, params, *, batch_tile=None, compute_dtype=jnp.bfloat16):
    """x: (N, L, C) float32 (or bfloat16 to also halve HBM traffic), C = 24*k."""
    N, L, C = x.shape
    itemsize = x.dtype.itemsize
    if batch_tile is None:
        batch_tile = _default_batch_tile(N, L, C, itemsize)
    if N % batch_tile != 0:
        raise ValueError(f"batch {N} must be divisible by batch_tile {batch_tile}")
    M = batch_tile * L
    if M % 8 != 0 and batch_tile != N:
        raise ValueError(
            f"batch_tile*L = {M} must be a multiple of 8 (or cover the full batch)")
    grid_n = N // batch_tile

    weights = pack_params(params, compute_dtype)
    w_in, w_stk, b_all = weights
    x2d = x.reshape(N * L, C)           # flatten batch into the row (sublane) dim

    in_specs = [
        pl.BlockSpec((M, C), lambda i: (i, 0)),
        pl.BlockSpec(w_in.shape, lambda i: (0, 0)),
        pl.BlockSpec(w_stk.shape, lambda i: (0, 0, 0)),
        pl.BlockSpec(b_all.shape, lambda i: (0, 0)),
    ]
    out_specs = pl.BlockSpec((M, C), lambda i: (i, 0))

    weight_bytes = sum(int(w.size) * w.dtype.itemsize for w in weights)
    block_bytes = M * C * itemsize
    # Input + output blocks are double-buffered; leave room for intermediates,
    # and cap the request so it fits v7x's 32 MiB scoped VMEM.
    vmem_limit = int(min(32 << 20, max(8 << 20, 16 * block_bytes + 4 * weight_bytes)))

    # 1 fused 1x1 matmul + 3 stages x 3 tap matmuls, each (row) x (C x C).
    flops = 2 * (N * L) * C * C * 10
    bytes_accessed = 2 * N * L * C * itemsize + weight_bytes

    out2d = pl.pallas_call(
        functools.partial(_inception_resnet_a_kernel,
                          seq_len=L, compute_dtype=compute_dtype),
        out_shape=jax.ShapeDtypeStruct((N * L, C), x.dtype),
        grid_spec=pltpu.PrefetchScalarGridSpec(
            num_scalar_prefetch=0,
            grid=(grid_n,),
            in_specs=in_specs,
            out_specs=out_specs,
        ),
        compiler_params=pltpu.CompilerParams(
            dimension_semantics=("parallel",),
            vmem_limit_bytes=vmem_limit,
        ),
        cost_estimate=pl.CostEstimate(
            flops=flops, transcendentals=0, bytes_accessed=bytes_accessed),
    )(x2d, *weights)
    # TODO(synk): at large k, single-buffer the grid-invariant weight inputs
    #             (pipeline_mode=pl.Buffered(1)) to halve their VMEM footprint.
    return out2d.reshape(N, L, C)


# --------------------------- parameter building -----------------------------

def _fold_bn(w, b, gamma, beta, mean, var, eps):
    # w: (ks, Cin, Cout), b: (Cout,)  -- inference-mode BN fold.
    scale = gamma / jnp.sqrt(var + eps)
    return w * scale, (b - mean) * scale + beta


def init_params(key, k=1):
    C = 24 * k
    H = 8 * k
    keys = iter(jax.random.split(key, 64))

    def conv_wb(cin, cout, ks):
        bound = 1.0 / math.sqrt(cin * ks)
        w = jax.random.uniform(next(keys), (ks, cin, cout), jnp.float32, -bound, bound)
        b = jax.random.uniform(next(keys), (cout,), jnp.float32, -bound, bound)
        return w, b

    def bn_wb(cout):
        gamma = jax.random.uniform(next(keys), (cout,), jnp.float32, 0.5, 1.5)
        beta = 0.1 * jax.random.normal(next(keys), (cout,), jnp.float32)
        mean = 0.1 * jax.random.normal(next(keys), (cout,), jnp.float32)
        var = jax.random.uniform(next(keys), (cout,), jnp.float32, 0.5, 1.5)
        return gamma, beta, mean, var

    def basic_conv(cin, cout, ks, eps):
        w, b = conv_wb(cin, cout, ks)
        g, bt, m, v = bn_wb(cout)
        wf, bf = _fold_bn(w, b, g, bt, m, v, eps)
        if ks == 1:
            wf = wf[0]                       # (Cin, Cout)
        return wf, bf.reshape(1, cout)

    eps_bc = 1e-4   # BasicConv BN eps
    eps_lin = 1e-5  # BasicConvLinear BN eps (PyTorch default)

    p = {}
    p["w11"], p["b11"] = basic_conv(C, H, 1, eps_bc)
    p["w21"], p["b21"] = basic_conv(C, H, 1, eps_bc)
    p["w22"], p["b22"] = basic_conv(H, H, 3, eps_bc)
    p["w31"], p["b31"] = basic_conv(C, H, 1, eps_bc)
    p["w32"], p["b32"] = basic_conv(H, H, 3, eps_bc)
    p["w33"], p["b33"] = basic_conv(H, H, 3, eps_bc)
    p["wc"], p["bc"] = basic_conv(C, C, 3, eps_lin)   # (3, C, C), (1, C)
    return p


# ----------------------------- pure-JAX reference ---------------------------

def _ref_forward(x, p, compute_dtype=jnp.float32):
    cd = compute_dtype

    def ein(t, w):
        return jnp.einsum("nlc,cd->nld", t.astype(cd), w.astype(cd),
                          preferred_element_type=jnp.float32)

    def c1(t, w, b):
        return ein(t, w) + b

    def c3(t, w, b):
        tp = jnp.pad(t, ((0, 0), (1, 1), (0, 0)))
        return (ein(tp[:, :-2], w[0]) + ein(tp[:, 1:-1], w[1])
                + ein(tp[:, 2:], w[2]) + b)

    relu = lambda t: jnp.maximum(t, 0.0)
    xf = x.astype(jnp.float32)
    b1 = relu(c1(xf, p["w11"], p["b11"]))
    b2 = relu(c3(relu(c1(xf, p["w21"], p["b21"])), p["w22"], p["b22"]))
    b3 = relu(c1(xf, p["w31"], p["b31"]))
    b3 = relu(c3(b3, p["w32"], p["b32"]))
    b3 = relu(c3(b3, p["w33"], p["b33"]))
    cat = jnp.concatenate([b1, b2, b3], axis=-1)
    y = c3(cat, p["wc"], p["bc"])
    return relu(y + xf)


# ---------------------------------- main -------------------------------------

if __name__ == "__main__":
    key = jax.random.PRNGKey(0)
    kx, kp = jax.random.split(key)

    N, L, C = 8, 64, 24            # batch=8, length=64, channels=24*k with k=1
    x = jax.random.normal(kx, (N, L, C), dtype=jnp.float32)
    params = init_params(kp, k=1)

    # 1) f32 compute, forced multi-block grid (grid=(4,), 2 samples per block)
    #    -> exact check of the fused math against the pure-JAX reference.
    out_f32 = jax.block_until_ready(
        inception_resnet_a(x, params, batch_tile=2, compute_dtype=jnp.float32))
    ref_f32 = _ref_forward(x, params, compute_dtype=jnp.float32)
    assert out_f32.shape == (N, L, C)
    diff_f32 = jnp.max(jnp.abs(out_f32 - ref_f32))
    assert jnp.allclose(out_f32, ref_f32, atol=1e-4, rtol=1e-4), \
        f"f32 max abs diff {diff_f32}"

    # 2) bf16 matmul operands (the performance default), default block sizing
    #    -> checked against a reference that applies the same bf16 casts.
    out_bf16 = jax.block_until_ready(inception_resnet_a(x, params))
    ref_bf16 = _ref_forward(x, params, compute_dtype=jnp.bfloat16)
    assert out_bf16.shape == (N, L, C)
    diff_bf16 = jnp.max(jnp.abs(out_bf16 - ref_bf16))
    assert jnp.allclose(out_bf16, ref_bf16, atol=1e-2, rtol=1e-2), \
        f"bf16 max abs diff {diff_bf16}"

    print("KERNEL_OK")
</pallas_src>

<mosaic_0001>
module attributes {stable_mosaic.version = 11 : i64} {
  func.func @_inception_resnet_a_kernel(%arg0: i32, %arg1: memref<128x24xf32, #tpu.memory_space<vmem>>, %arg2: memref<24x24xf32, #tpu.memory_space<vmem>>, %arg3: memref<9x24x24xf32, #tpu.memory_space<vmem>>, %arg4: memref<4x24xf32, #tpu.memory_space<vmem>>, %arg5: memref<128x24xf32, #tpu.memory_space<vmem>>) attributes {dimension_semantics = [#tpu.dimension_semantics<parallel>], iteration_bounds = array<i64: 4>, scalar_prefetch = 0 : i64, scratch_operands = 0 : i64, tpu.core_type = #tpu.core_type<tc>, window_params = [{transform_indices = @transform_0, window_bounds = array<i64: 128, 24>}, {pipeline_mode = #tpu.pipeline_mode<synchronous>, transform_indices = @transform_1, window_bounds = array<i64: 24, 24>}, {pipeline_mode = #tpu.pipeline_mode<synchronous>, transform_indices = @transform_2, window_bounds = array<i64: 9, 24, 24>}, {pipeline_mode = #tpu.pipeline_mode<synchronous>, transform_indices = @transform_3, window_bounds = array<i64: 4, 24>}, {transform_indices = @transform_4, window_bounds = array<i64: 128, 24>}]} {
    %c0 = arith.constant 0 : index
    %c0_0 = arith.constant 0 : index
    %0 = vector.load %arg1[%c0, %c0_0] : memref<128x24xf32, #tpu.memory_space<vmem>>, vector<128x24xf32>
    %1 = tpu.iota {dimensions = array<i32: 0>} : vector<128x1xi32>
    %c64_i32 = arith.constant 64 : i32
    %c0_i32 = arith.constant 0 : i32
    %2 = arith.cmpi eq, %c64_i32, %c0_i32 : i32
    %c1_i32 = arith.constant 1 : i32
    %3 = arith.select %2, %c1_i32, %c64_i32 : i32
    %4 = vector.broadcast %3 : i32 to vector<128x1xi32>
    %5 = arith.remsi %1, %4 : vector<128x1xi32>
    %c0_i32_1 = arith.constant 0 : i32
    %6 = vector.broadcast %c0_i32_1 : i32 to vector<128x1xi32>
    %7 = arith.cmpi ne, %5, %6 : vector<128x1xi32>
    %c0_i32_2 = arith.constant 0 : i32
    %8 = vector.broadcast %c0_i32_2 : i32 to vector<128x1xi32>
    %9 = arith.cmpi slt, %5, %8 : vector<128x1xi32>
    %c0_i32_3 = arith.constant 0 : i32
    %10 = arith.cmpi slt, %3, %c0_i32_3 : i32
    %11 = vector.broadcast %10 : i1 to vector<128x1xi1>
    %12 = vector.broadcast %11 : vector<128x1xi1> to vector<128x1xi1>
    %13 = arith.xori %9, %12 : vector<128x1xi1>
    %14 = arith.andi %13, %7 : vector<128x1xi1>
    %15 = vector.broadcast %3 : i32 to vector<128x1xi32>
    %16 = arith.addi %5, %15 : vector<128x1xi32>
    %17 = arith.select %14, %16, %5 : vector<128x1xi1>, vector<128x1xi32>
    %c1_i32_4 = arith.constant 1 : i32
    %18 = vector.broadcast %c1_i32_4 : i32 to vector<128x1xi32>
    %19 = arith.cmpi sge, %17, %18 : vector<128x1xi32>
    %c63_i32 = arith.constant 63 : i32
    %20 = vector.broadcast %c63_i32 : i32 to vector<128x1xi32>
    %21 = arith.cmpi slt, %17, %20 : vector<128x1xi32>
    %c0_5 = arith.constant 0 : index
    %c0_6 = arith.constant 0 : index
    %22 = vector.load %arg2[%c0_5, %c0_6] : memref<24x24xf32, #tpu.memory_space<vmem>>, vector<24x24xf32>
    %cst = arith.constant dense<0.000000e+00> : vector<128x24xf32>
    %23 = tpu.matmul %0, %22, %cst {dimension_numbers = #tpu.dot_dimension_numbers<[1], [0], [0], [1], [0, 0, 1, 1], [], []>} : vector<128x24xf32>, vector<24x24xf32>, vector<128x24xf32> -> vector<128x24xf32>
    %c0_7 = arith.constant 0 : index
    %c0_8 = arith.constant 0 : index
    %24 = vector.load %arg4[%c0_7, %c0_8] : memref<4x24xf32, #tpu.memory_space<vmem>>, vector<1x24xf32>
    %25 = vector.broadcast %24 : vector<1x24xf32> to vector<128x24xf32>
    %26 = arith.addf %23, %25 : vector<128x24xf32>
    %cst_9 = arith.constant 0.000000e+00 : f32
    %27 = vector.broadcast %cst_9 : f32 to vector<128x24xf32>
    %28 = arith.maximumf %26, %27 : vector<128x24xf32>
    %c1_i32_10 = arith.constant 1 : i32
    %29 = tpu.dynamic_rotate %28 by %c1_i32_10 dim 0 : vector<128x24xf32>, i32 -> vector<128x24xf32>
    %cst_11 = arith.constant 0.000000e+00 : f32
    %30 = vector.shape_cast %19 : vector<128x1xi1> to vector<128x1xi1>
    %31 = vector.broadcast %30 : vector<128x1xi1> to vector<128x24xi1>
    %32 = vector.broadcast %cst_11 : f32 to vector<128x24xf32>
    %33 = arith.select %31, %29, %32 : vector<128x24xi1>, vector<128x24xf32>
    %c127_i32 = arith.constant 127 : i32
    %34 = tpu.dynamic_rotate %28 by %c127_i32 dim 0 : vector<128x24xf32>, i32 -> vector<128x24xf32>
    %cst_12 = arith.constant 0.000000e+00 : f32
    %35 = vector.shape_cast %21 : vector<128x1xi1> to vector<128x1xi1>
    %36 = vector.broadcast %35 : vector<128x1xi1> to vector<128x24xi1>
    %37 = vector.broadcast %cst_12 : f32 to vector<128x24xf32>
    %38 = arith.select %36, %34, %37 : vector<128x24xi1>, vector<128x24xf32>
    %c0_13 = arith.constant 0 : index
    %c0_14 = arith.constant 0 : index
    %c0_15 = arith.constant 0 : index
    %39 = vector.load %arg3[%c0_13, %c0_14, %c0_15] : memref<9x24x24xf32, #tpu.memory_space<vmem>>, vector<1x24x24xf32>
    %40 = vector.shape_cast %39 : vector<1x24x24xf32> to vector<24x24xf32>
    %cst_16 = arith.constant dense<0.000000e+00> : vector<128x24xf32>
    %41 = tpu.matmul %33, %40, %cst_16 {dimension_numbers = #tpu.dot_dimension_numbers<[1], [0], [0], [1], [0, 0, 1, 1], [], []>} : vector<128x24xf32>, vector<24x24xf32>, vector<128x24xf32> -> vector<128x24xf32>
    %c1 = arith.constant 1 : index
    %c0_17 = arith.constant 0 : index
    %c0_18 = arith.constant 0 : index
    %42 = vector.load %arg3[%c1, %c0_17, %c0_18] : memref<9x24x24xf32, #tpu.memory_space<vmem>>, vector<1x24x24xf32>
    %43 = vector.shape_cast %42 : vector<1x24x24xf32> to vector<24x24xf32>
    %cst_19 = arith.constant dense<0.000000e+00> : vector<128x24xf32>
    %44 = tpu.matmul %28, %43, %cst_19 {dimension_numbers = #tpu.dot_dimension_numbers<[1], [0], [0], [1], [0, 0, 1, 1], [], []>} : vector<128x24xf32>, vector<24x24xf32>, vector<128x24xf32> -> vector<128x24xf32>
    %45 = arith.addf %41, %44 : vector<128x24xf32>
    %c2 = arith.constant 2 : index
    %c0_20 = arith.constant 0 : index
    %c0_21 = arith.constant 0 : index
    %46 = vector.load %arg3[%c2, %c0_20, %c0_21] : memref<9x24x24xf32, #tpu.memory_space<vmem>>, vector<1x24x24xf32>
    %47 = vector.shape_cast %46 : vector<1x24x24xf32> to vector<24x24xf32>
    %cst_22 = arith.constant dense<0.000000e+00> : vector<128x24xf32>
    %48 = tpu.matmul %38, %47, %cst_22 {dimension_numbers = #tpu.dot_dimension_numbers<[1], [0], [0], [1], [0, 0, 1, 1], [], []>} : vector<128x24xf32>, vector<24x24xf32>, vector<128x24xf32> -> vector<128x24xf32>
    %49 = arith.addf %45, %48 : vector<128x24xf32>
    %c1_23 = arith.constant 1 : index
    %c0_24 = arith.constant 0 : index
    %50 = vector.load %arg4[%c1_23, %c0_24] : memref<4x24xf32, #tpu.memory_space<vmem>>, vector<1x24xf32>
    %51 = vector.broadcast %50 : vector<1x24xf32> to vector<128x24xf32>
    %52 = arith.addf %49, %51 : vector<128x24xf32>
    %cst_25 = arith.constant 0.000000e+00 : f32
    %53 = vector.broadcast %cst_25 : f32 to vector<128x24xf32>
    %54 = arith.maximumf %52, %53 : vector<128x24xf32>
    %c1_i32_26 = arith.constant 1 : i32
    %55 = tpu.dynamic_rotate %54 by %c1_i32_26 dim 0 : vector<128x24xf32>, i32 -> vector<128x24xf32>
    %cst_27 = arith.constant 0.000000e+00 : f32
    %56 = vector.shape_cast %19 : vector<128x1xi1> to vector<128x1xi1>
    %57 = vector.broadcast %56 : vector<128x1xi1> to vector<128x24xi1>
    %58 = vector.broadcast %cst_27 : f32 to vector<128x24xf32>
    %59 = arith.select %57, %55, %58 : vector<128x24xi1>, vector<128x24xf32>
    %c127_i32_28 = arith.constant 127 : i32
    %60 = tpu.dynamic_rotate %54 by %c127_i32_28 dim 0 : vector<128x24xf32>, i32 -> vector<128x24xf32>
    %cst_29 = arith.constant 0.000000e+00 : f32
    %61 = vector.shape_cast %21 : vector<128x1xi1> to vector<128x1xi1>
    %62 = vector.broadcast %61 : vector<128x1xi1> to vector<128x24xi1>
    %63 = vector.broadcast %cst_29 : f32 to vector<128x24xf32>
    %64 = arith.select %62, %60, %63 : vector<128x24xi1>, vector<128x24xf32>
    %c3 = arith.constant 3 : index
    %c0_30 = arith.constant 0 : index
    %c0_31 = arith.constant 0 : index
    %65 = vector.load %arg3[%c3, %c0_30, %c0_31] : memref<9x24x24xf32, #tpu.memory_space<vmem>>, vector<1x24x24xf32>
    %66 = vector.shape_cast %65 : vector<1x24x24xf32> to vector<24x24xf32>
    %cst_32 = arith.constant dense<0.000000e+00> : vector<128x24xf32>
    %67 = tpu.matmul %59, %66, %cst_32 {dimension_numbers = #tpu.dot_dimension_numbers<[1], [0], [0], [1], [0, 0, 1, 1], [], []>} : vector<128x24xf32>, vector<24x24xf32>, vector<128x24xf32> -> vector<128x24xf32>
    %c4 = arith.constant 4 : index
    %c0_33 = arith.constant 0 : index
    %c0_34 = arith.constant 0 : index
    %68 = vector.load %arg3[%c4, %c0_33, %c0_34] : memref<9x24x24xf32, #tpu.memory_space<vmem>>, vector<1x24x24xf32>
    %69 = vector.shape_cast %68 : vector<1x24x24xf32> to vector<24x24xf32>
    %cst_35 = arith.constant dense<0.000000e+00> : vector<128x24xf32>
    %70 = tpu.matmul %54, %69, %cst_35 {dimension_numbers = #tpu.dot_dimension_numbers<[1], [0], [0], [1], [0, 0, 1, 1], [], []>} : vector<128x24xf32>, vector<24x24xf32>, vector<128x24xf32> -> vector<128x24xf32>
    %71 = arith.addf %67, %70 : vector<128x24xf32>
    %c5 = arith.constant 5 : index
    %c0_36 = arith.constant 0 : index
    %c0_37 = arith.constant 0 : index
    %72 = vector.load %arg3[%c5, %c0_36, %c0_37] : memref<9x24x24xf32, #tpu.memory_space<vmem>>, vector<1x24x24xf32>
    %73 = vector.shape_cast %72 : vector<1x24x24xf32> to vector<24x24xf32>
    %cst_38 = arith.constant dense<0.000000e+00> : vector<128x24xf32>
    %74 = tpu.matmul %64, %73, %cst_38 {dimension_numbers = #tpu.dot_dimension_numbers<[1], [0], [0], [1], [0, 0, 1, 1], [], []>} : vector<128x24xf32>, vector<24x24xf32>, vector<128x24xf32> -> vector<128x24xf32>
    %75 = arith.addf %71, %74 : vector<128x24xf32>
    %c2_39 = arith.constant 2 : index
    %c0_40 = arith.constant 0 : index
    %76 = vector.load %arg4[%c2_39, %c0_40] : memref<4x24xf32, #tpu.memory_space<vmem>>, vector<1x24xf32>
    %77 = vector.broadcast %76 : vector<1x24xf32> to vector<128x24xf32>
    %78 = arith.addf %75, %77 : vector<128x24xf32>
    %cst_41 = arith.constant 0.000000e+00 : f32
    %79 = vector.broadcast %cst_41 : f32 to vector<128x24xf32>
    %80 = arith.maximumf %78, %79 : vector<128x24xf32>
    %c1_i32_42 = arith.constant 1 : i32
    %81 = tpu.dynamic_rotate %80 by %c1_i32_42 dim 0 : vector<128x24xf32>, i32 -> vector<128x24xf32>
    %cst_43 = arith.constant 0.000000e+00 : f32
    %82 = vector.shape_cast %19 : vector<128x1xi1> to vector<128x1xi1>
    %83 = vector.broadcast %82 : vector<128x1xi1> to vector<128x24xi1>
    %84 = vector.broadcast %cst_43 : f32 to vector<128x24xf32>
    %85 = arith.select %83, %81, %84 : vector<128x24xi1>, vector<128x24xf32>
    %c127_i32_44 = arith.constant 127 : i32
    %86 = tpu.dynamic_rotate %80 by %c127_i32_44 dim 0 : vector<128x24xf32>, i32 -> vector<128x24xf32>
    %cst_45 = arith.constant 0.000000e+00 : f32
    %87 = vector.shape_cast %21 : vector<128x1xi1> to vector<128x1xi1>
    %88 = vector.broadcast %87 : vector<128x1xi1> to vector<128x24xi1>
    %89 = vector.broadcast %cst_45 : f32 to vector<128x24xf32>
    %90 = arith.select %88, %86, %89 : vector<128x24xi1>, vector<128x24xf32>
    %c6 = arith.constant 6 : index
    %c0_46 = arith.constant 0 : index
    %c0_47 = arith.constant 0 : index
    %91 = vector.load %arg3[%c6, %c0_46, %c0_47] : memref<9x24x24xf32, #tpu.memory_space<vmem>>, vector<1x24x24xf32>
    %92 = vector.shape_cast %91 : vector<1x24x24xf32> to vector<24x24xf32>
    %cst_48 = arith.constant dense<0.000000e+00> : vector<128x24xf32>
    %93 = tpu.matmul %85, %92, %cst_48 {dimension_numbers = #tpu.dot_dimension_numbers<[1], [0], [0], [1], [0, 0, 1, 1], [], []>} : vector<128x24xf32>, vector<24x24xf32>, vector<128x24xf32> -> vector<128x24xf32>
    %c7 = arith.constant 7 : index
    %c0_49 = arith.constant 0 : index
    %c0_50 = arith.constant 0 : index
    %94 = vector.load %arg3[%c7, %c0_49, %c0_50] : memref<9x24x24xf32, #tpu.memory_space<vmem>>, vector<1x24x24xf32>
    %95 = vector.shape_cast %94 : vector<1x24x24xf32> to vector<24x24xf32>
    %cst_51 = arith.constant dense<0.000000e+00> : vector<128x24xf32>
    %96 = tpu.matmul %80, %95, %cst_51 {dimension_numbers = #tpu.dot_dimension_numbers<[1], [0], [0], [1], [0, 0, 1, 1], [], []>} : vector<128x24xf32>, vector<24x24xf32>, vector<128x24xf32> -> vector<128x24xf32>
    %97 = arith.addf %93, %96 : vector<128x24xf32>
    %c8 = arith.constant 8 : index
    %c0_52 = arith.constant 0 : index
    %c0_53 = arith.constant 0 : index
    %98 = vector.load %arg3[%c8, %c0_52, %c0_53] : memref<9x24x24xf32, #tpu.memory_space<vmem>>, vector<1x24x24xf32>
    %99 = vector.shape_cast %98 : vector<1x24x24xf32> to vector<24x24xf32>
    %cst_54 = arith.constant dense<0.000000e+00> : vector<128x24xf32>
    %100 = tpu.matmul %90, %99, %cst_54 {dimension_numbers = #tpu.dot_dimension_numbers<[1], [0], [0], [1], [0, 0, 1, 1], [], []>} : vector<128x24xf32>, vector<24x24xf32>, vector<128x24xf32> -> vector<128x24xf32>
    %101 = arith.addf %97, %100 : vector<128x24xf32>
    %c3_55 = arith.constant 3 : index
    %c0_56 = arith.constant 0 : index
    %102 = vector.load %arg4[%c3_55, %c0_56] : memref<4x24xf32, #tpu.memory_space<vmem>>, vector<1x24xf32>
    %103 = vector.broadcast %102 : vector<1x24xf32> to vector<128x24xf32>
    %104 = arith.addf %101, %103 : vector<128x24xf32>
    %105 = arith.addf %104, %0 : vector<128x24xf32>
    %cst_57 = arith.constant 0.000000e+00 : f32
    %106 = vector.broadcast %cst_57 : f32 to vector<128x24xf32>
    %107 = arith.maximumf %105, %106 : vector<128x24xf32>
    %c0_58 = arith.constant 0 : index
    %c0_59 = arith.constant 0 : index
    %108 = vector.load %arg5[%c0_58, %c0_59] : memref<128x24xf32, #tpu.memory_space<vmem>>, vector<128x24xf32>
    tpu.vector_store %arg5[%c0_58, %c0_59], %107 {strides = array<i32>} : memref<128x24xf32, #tpu.memory_space<vmem>>, vector<128x24xf32>,
    return
  }
  func.func @transform_0(%arg0: i32) -> (i32, i32) {
    %c0_i32 = arith.constant 0 : i32
    %c0_i32_0 = arith.constant 0 : i32
    return %arg0, %c0_i32 : i32, i32
  }
  func.func @transform_1(%arg0: i32) -> (i32, i32) {
    %c0_i32 = arith.constant 0 : i32
    %c0_i32_0 = arith.constant 0 : i32
    %c0_i32_1 = arith.constant 0 : i32
    return %c0_i32, %c0_i32_0 : i32, i32
  }
  func.func @transform_2(%arg0: i32) -> (i32, i32, i32) {
    %c0_i32 = arith.constant 0 : i32
    %c0_i32_0 = arith.constant 0 : i32
    %c0_i32_1 = arith.constant 0 : i32
    %c0_i32_2 = arith.constant 0 : i32
    return %c0_i32, %c0_i32_0, %c0_i32_1 : i32, i32, i32
  }
  func.func @transform_3(%arg0: i32) -> (i32, i32) {
    %c0_i32 = arith.constant 0 : i32
    %c0_i32_0 = arith.constant 0 : i32
    %c0_i32_1 = arith.constant 0 : i32
    return %c0_i32, %c0_i32_0 : i32, i32
  }
  func.func @transform_4(%arg0: i32) -> (i32, i32) {
    %c0_i32 = arith.constant 0 : i32
    %c0_i32_0 = arith.constant 0 : i32
    return %arg0, %c0_i32 : i32, i32
  }
}

</mosaic_0001>

<llo_original>
// kernel: tpu_custom_call.1
$region0: #{tpu_custom_call.1}
  #allocation0 [shape = 'u32[]', space=smem, size = 0x4, offset = 0x4, fixed_abs, tag = 'smem constant byte address 0x4 - core index']
  #allocation1 [shape = 'u32[144,128]{1,0:T(1,128)}', space=vmem, size = 0x12000, scoped, tag = 'internal scratch']
  %s0 = inlined_call_operand.vmem [shape: f32[512,24], index: 0, kind: input, shape index: {}]
  %s1 = inlined_call_operand.vmem [shape: f32[24,24], index: 1, kind: input, shape index: {}]
  %s2 = inlined_call_operand.vmem [shape: f32[9,24,24], index: 2, kind: input, shape index: {}]
  %s3 = inlined_call_operand.vmem [shape: f32[4,24], index: 3, kind: input, shape index: {}]
  %s4 = inlined_call_operand.vmem [shape: f32[512,24], index: 4, kind: output, shape index: {}]
  %s5 = sld [smem:[#allocation0]]
  $region49: #{tpu_custom_call.1} parent=0
    _
  %s7 = ssub.s32 1, %s5
  %s8 = scalar_select 0, %s7, %s5
  loop: start=0, step=1, limit=6
  $region2: #{tpu_custom_call.1} parent=0 // loop_pre_header
    _
  $region3: #{tpu_custom_call.1} parent=0 // loop_header
    %s10 = sphi 0, %s14
    %p11 = scmp.ge.s32.totalorder %s10, 6
    %s20 = sphi 0, %s22
    %s23 = sphi 0, %s20
    %s24 = sphi 0, %s23
    %s40 = sphi 0, %s24
    %s44 = sphi 0, %s44
    %s46 = sphi 0, %s44
    %s47 = sphi 0, %s46
    %s61 = sphi 0, %s47
    %s65 = sphi 0, %s65
    %s67 = sphi 0, %s65
    %s68 = sphi 0, %s67
    %s82 = sphi 0, %s68
    %s86 = sphi 0, %s86
    %s88 = sphi 0, %s86
    %s89 = sphi 0, %s88
    %s103 = sphi 0, %s89
    %s109 = sphi 0, %s111
    %s112 = sphi 0, %s109
    %s113 = sphi 0, %s112
    %s129 = sphi 0, %s113
  $region4: #{tpu_custom_call.1} parent=0 // loop_header_branch
    %13 = sbr.rel (%p11) target = $region8
  $region5: #{tpu_custom_call.1} parent=0 // loop_body
    %s15 = ssub.s32 %s10, 1
    %s16 = ssub.s32 %s10, 2
    %s17 = sadd.s32 %s10, 1
    %s18 = ssub.s32 %s10, %s17
    %p19 = scmp.eq.s32.totalorder %s18, 0
    %s21 = sadd.s32 %s20, 1
    %s22 = scalar_select %p19, %s20, %s21
    %p25 = pneg %p19
    %p26 = scmp.eq.s32.totalorder %s10, 3
    %p27 = por %p25, %p26
    %p28 = scmp.ne.s32.totalorder %s20, %s23
    %p29 = scmp.eq.s32.totalorder %s10, 0
    %p30 = por %p28, %p29
    %p31 = scmp.ne.s32.totalorder %s20, %s23
    %p32 = scmp.eq.s32.totalorder %s15, 3
    %p33 = por %p31, %p32
    %p34 = scmp.ne.s32.totalorder %s23, %s24
    %p35 = scmp.eq.s32.totalorder %s15, 0
    %p36 = por %p34, %p35
    %p37 = scmp.ne.s32.totalorder %s23, %s24
    %p38 = scmp.eq.s32.totalorder %s16, 3
    %p39 = por %p37, %p38
    %p41 = scmp.ne.s32.totalorder %s24, %s40
    %p42 = scmp.eq.s32.totalorder %s16, 0
    %p43 = por %p41, %p42
    %s45 = sadd.s32 %s44, 1
    %p48 = scmp.eq.s32.totalorder %s10, 3
    %p49 = scmp.ne.s32.totalorder %s44, %s46
    %p50 = scmp.eq.s32.totalorder %s10, 0
    %p51 = por %p49, %p50
    %p52 = scmp.ne.s32.totalorder %s44, %s46
    %p53 = scmp.eq.s32.totalorder %s15, 3
    %p54 = por %p52, %p53
    %p55 = scmp.ne.s32.totalorder %s46, %s47
    %p56 = scmp.eq.s32.totalorder %s15, 0
    %p57 = por %p55, %p56
    %p58 = scmp.ne.s32.totalorder %s46, %s47
    %p59 = scmp.eq.s32.totalorder %s16, 3
    %p60 = por %p58, %p59
    %p62 = scmp.ne.s32.totalorder %s47, %s61
    %p63 = scmp.eq.s32.totalorder %s16, 0
    %p64 = por %p62, %p63
    %s66 = sadd.s32 %s65, 1
    %p69 = scmp.eq.s32.totalorder %s10, 3
    %p70 = scmp.ne.s32.totalorder %s65, %s67
    %p71 = scmp.eq.s32.totalorder %s10, 0
    %p72 = por %p70, %p71
    %p73 = scmp.ne.s32.totalorder %s65, %s67
    %p74 = scmp.eq.s32.totalorder %s15, 3
    %p75 = por %p73, %p74
    %p76 = scmp.ne.s32.totalorder %s67, %s68
    %p77 = scmp.eq.s32.totalorder %s15, 0
    %p78 = por %p76, %p77
    %p79 = scmp.ne.s32.totalorder %s67, %s68
    %p80 = scmp.eq.s32.totalorder %s16, 3
    %p81 = por %p79, %p80
    %p83 = scmp.ne.s32.totalorder %s68, %s82
    %p84 = scmp.eq.s32.totalorder %s16, 0
    %p85 = por %p83, %p84
    %s87 = sadd.s32 %s86, 1
    %p90 = scmp.eq.s32.totalorder %s10, 3
    %p91 = scmp.ne.s32.totalorder %s86, %s88
    %p92 = scmp.eq.s32.totalorder %s10, 0
    %p93 = por %p91, %p92
    %p94 = scmp.ne.s32.totalorder %s86, %s88
    %p95 = scmp.eq.s32.totalorder %s15, 3
    %p96 = por %p94, %p95
    %p97 = scmp.ne.s32.totalorder %s88, %s89
    %p98 = scmp.eq.s32.totalorder %s15, 0
    %p99 = por %p97, %p98
    %p100 = scmp.ne.s32.totalorder %s88, %s89
    %p101 = scmp.eq.s32.totalorder %s16, 3
    %p102 = por %p100, %p101
    %p104 = scmp.ne.s32.totalorder %s89, %s103
    %p105 = scmp.eq.s32.totalorder %s16, 0
    %p106 = por %p104, %p105
    %s107 = ssub.s32 %s10, %s17
    %p108 = scmp.eq.s32.totalorder %s107, 0
    %s110 = sadd.s32 %s109, 1
    %s111 = scalar_select %p108, %s109, %s110
    %p114 = pneg %p108
    %p115 = scmp.eq.s32.totalorder %s10, 3
    %p116 = por %p114, %p115
    %p117 = scmp.ne.s32.totalorder %s109, %s112
    %p118 = scmp.eq.s32.totalorder %s10, 0
    %p119 = por %p117, %p118
    %p120 = scmp.ne.s32.totalorder %s109, %s112
    %p121 = scmp.eq.s32.totalorder %s15, 3
    %p122 = por %p120, %p121
    %p123 = scmp.ne.s32.totalorder %s112, %s113
    %p124 = scmp.eq.s32.totalorder %s15, 0
    %p125 = por %p123, %p124
    %p126 = scmp.ne.s32.totalorder %s112, %s113
    %p127 = scmp.eq.s32.totalorder %s16, 3
    %p128 = por %p126, %p127
    %p130 = scmp.ne.s32.totalorder %s113, %s129
    %p131 = scmp.eq.s32.totalorder %s16, 0
    %p132 = por %p130, %p131
    %p133 = scmp.le.s32.totalorder 1, %s10
    %p134 = scmp.lt.s32.totalorder %s10, 5
    %p135 = pnand %p133, %p134
    %p136 = pneg %p135
    // Predicated region
    $region9: #{tpu_custom_call.1} parent=5 // pred_check
      _
    $region10: #{tpu_custom_call.1} parent=5 // pred_check_branch
      %138 = sbr.rel (%p135) target = $region12
    $region11: #{tpu_custom_call.1} parent=5 // pred_region
      %s139 = ssub.s32 %s10, 1
      // Predicated region
      $region13: #{tpu_custom_call.1} parent=11 // pred_check
        %p140 = pneg %p57
      $region14: #{tpu_custom_call.1} parent=11 // pred_check_branch
        %142 = sbr.rel (%p140) target = $region16
      $region15: #{tpu_custom_call.1} parent=11 // pred_region
        _
      $region16: #{tpu_custom_call.1} parent=11 // pred_fallthru
        _
      // Predicated region
      $region17: #{tpu_custom_call.1} parent=11 // pred_check
        %p143 = pneg %p78
      $region18: #{tpu_custom_call.1} parent=11 // pred_check_branch
        %145 = sbr.rel (%p143) target = $region20
      $region19: #{tpu_custom_call.1} parent=11 // pred_region
        _
      $region20: #{tpu_custom_call.1} parent=11 // pred_fallthru
        _
      // Predicated region
      $region21: #{tpu_custom_call.1} parent=11 // pred_check
        %p146 = pneg %p99
      $region22: #{tpu_custom_call.1} parent=11 // pred_check_branch
        %148 = sbr.rel (%p146) target = $region24
      $region23: #{tpu_custom_call.1} parent=11 // pred_region
        _
      $region24: #{tpu_custom_call.1} parent=11 // pred_fallthru
        _
    $region12: #{tpu_custom_call.1} parent=5 // pred_fallthru
      _
    %p149 = scmp.lt.s32.totalorder %s10, 4
    // Predicated region
    $region25: #{tpu_custom_call.1} parent=5 // pred_check
      %p150 = pneg %p149
    $region26: #{tpu_custom_call.1} parent=5 // pred_check_branch
      %152 = sbr.rel (%p150) target = $region28
    $region27: #{tpu_custom_call.1} parent=5 // pred_region
      // Predicated region
      $region29: #{tpu_custom_call.1} parent=27 // pred_check
        %p153 = pneg %p30
      $region30: #{tpu_custom_call.1} parent=27 // pred_check_branch
        %155 = sbr.rel (%p153) target = $region32
      $region31: #{tpu_custom_call.1} parent=27 // pred_region
        %s156 = smul.u32 16, %s10
        %p157 = scmp.lt.s32.totalorder %s156, 63
        %s158 = scalar_select %p157, %s156, 63
        %s159 = smul.addr %s158, 8
        %s160 = scalar_lea.vmem %s0, %s159
        %s161 = smul.u32 16, %s10
      $region32: #{tpu_custom_call.1} parent=27 // pred_fallthru
        _
    $region28: #{tpu_custom_call.1} parent=5 // pred_fallthru
      _
    %p162 = scmp.le.s32.totalorder 1, %s10
    %p163 = scmp.lt.s32.totalorder %s10, 5
    %p164 = pnand %p162, %p163
    %p165 = pneg %p164
    // Predicated region
    $region33: #{tpu_custom_call.1} parent=5 // pred_check
      _
    $region34: #{tpu_custom_call.1} parent=5 // pred_check_branch
      %167 = sbr.rel (%p164) target = $region36
    $region35: #{tpu_custom_call.1} parent=5 // pred_region
      %s168 = ssub.s32 %s10, 1
      %s169 = smul.u32 16, %s15
      %p170 = scmp.lt.s32.totalorder %s169, 63
      %s171 = scalar_select %p170, %s169, 63
      %s172 = smul.addr %s171, 8
      %s173 = scalar_lea.vmem %s0, %s172
      %p174 = pneg %p36
      %p175 = pneg %p33
      %p176 = pneg %p57
      %p177 = pneg %p54
      %p178 = pneg %p78
      %p179 = pneg %p75
      %p180 = pneg %p99
      %p181 = pneg %p96
      %p182 = pneg %p125
      %p183 = pneg %p122
      %s184 = smul.u32 16, %s15
      %p185 = scmp.lt.s32.totalorder %s184, 63
      %s186 = scalar_select %p185, %s184, 63
      %s187 = smul.addr %s186, 8
      %s188 = scalar_lea.vmem %s4, %s187
      %s189 = smul.u32 16, %s15
      %p190 = scmp.lt.s32.totalorder %s189, 63
      %s191 = scalar_select %p190, %s189, 63
      %s192 = smul.addr %s191, 8
      %s193 = scalar_lea.vmem %s0, %s192
      %s194 = smul.u32 16, %s15
      %s195 = smul.u32 16, %s15
      %p196 = scmp.lt.s32.totalorder %s195, 63
      %s197 = scalar_select %p196, %s195, 63
      %s198 = smul.addr %s197, 8
      %s199 = scalar_lea.vmem %s4, %s198
      %s200 = smul.u32 16, %s15
      %v201 = vld [vmem:[%s193] sm:$0xff]
      %v202 = vld [vmem:[%s193 + $0x8] sm:$0xff]
      %v203 = vld [vmem:[%s193 + $0x10] sm:$0xff]
      %v204 = vld [vmem:[%s193 + $0x18] sm:$0xff]
      %v205 = vld [vmem:[%s193 + $0x20] sm:$0xff]
      %v206 = vld [vmem:[%s193 + $0x28] sm:$0xff]
      %v207 = vld [vmem:[%s193 + $0x30] sm:$0xff]
      %v208 = vld [vmem:[%s193 + $0x38] sm:$0xff]
      %v209 = vld [vmem:[%s193 + $0x40] sm:$0xff]
      %v210 = vld [vmem:[%s193 + $0x48] sm:$0xff]
      %v211 = vld [vmem:[%s193 + $0x50] sm:$0xff]
      %v212 = vld [vmem:[%s193 + $0x58] sm:$0xff]
      %v213 = vld [vmem:[%s193 + $0x60] sm:$0xff]
      %v214 = vld [vmem:[%s193 + $0x68] sm:$0xff]
      %v215 = vld [vmem:[%s193 + $0x70] sm:$0xff]
      %v216 = vld [vmem:[%s193 + $0x78] sm:$0xff]
      %v217 = vlaneseq
      %v218 = vshrl.u32 %v217, 7
      %v219 = vadd.s32 %v218, 8
      %v220 = vadd.s32 %v218, 16
      %v221 = vadd.s32 %v218, 24
      %v222 = vadd.s32 %v218, 32
      %v223 = vadd.s32 %v218, 40
      %v224 = vadd.s32 %v218, 48
      %v225 = vadd.s32 %v218, 56
      %v226 = vadd.s32 %v218, 64
      %v227 = vadd.s32 %v218, 72
      %v228 = vadd.s32 %v218, 80
      %v229 = vadd.s32 %v218, 88
      %v230 = vadd.s32 %v218, 96
      %v231 = vadd.s32 %v218, 104
      %v232 = vadd.s32 %v218, 112
      %v233 = vadd.s32 %v218, 120
      %vm234 = vcmp.lt.s32.totalorder %v218, 0
      %v235 = vsub.s32 0, %v218
      %v236 = vsel %vm234, %v235, %v218
      %v237 = vshrl.u32 %v236, 6
      %v238 = vand.u32 %v236, 63
      %v239 = vsub.s32 0, %v238
      %v240 = vsel %vm234, %v239, %v238
      %vm241 = vcmp.lt.s32.totalorder %v219, 0
      %v242 = vsub.s32 0, %v219
      %v243 = vsel %vm241, %v242, %v219
      %v244 = vshrl.u32 %v243, 6
      %v245 = vand.u32 %v243, 63
      %v246 = vsub.s32 0, %v245
      %v247 = vsel %vm241, %v246, %v245
      %vm248 = vcmp.lt.s32.totalorder %v220, 0
      %v249 = vsub.s32 0, %v220
      %v250 = vsel %vm248, %v249, %v220
      %v251 = vshrl.u32 %v250, 6
      %v252 = vand.u32 %v250, 63
      %v253 = vsub.s32 0, %v252
      %v254 = vsel %vm248, %v253, %v252
      %vm255 = vcmp.lt.s32.totalorder %v221, 0
      %v256 = vsub.s32 0, %v221
      %v257 = vsel %vm255, %v256, %v221
      %v258 = vshrl.u32 %v257, 6
      %v259 = vand.u32 %v257, 63
      %v260 = vsub.s32 0, %v259
      %v261 = vsel %vm255, %v260, %v259
      %vm262 = vcmp.lt.s32.totalorder %v222, 0
      %v263 = vsub.s32 0, %v222
      %v264 = vsel %vm262, %v263, %v222
      %v265 = vshrl.u32 %v264, 6
      %v266 = vand.u32 %v264, 63
      %v267 = vsub.s32 0, %v266
      %v268 = vsel %vm262, %v267, %v266
      %vm269 = vcmp.lt.s32.totalorder %v223, 0
      %v270 = vsub.s32 0, %v223
      %v271 = vsel %vm269, %v270, %v223
      %v272 = vshrl.u32 %v271, 6
      %v273 = vand.u32 %v271, 63
      %v274 = vsub.s32 0, %v273
      %v275 = vsel %vm269, %v274, %v273
      %vm276 = vcmp.lt.s32.totalorder %v224, 0
      %v277 = vsub.s32 0, %v224
      %v278 = vsel %vm276, %v277, %v224
      %v279 = vshrl.u32 %v278, 6
      %v280 = vand.u32 %v278, 63
      %v281 = vsub.s32 0, %v280
      %v282 = vsel %vm276, %v281, %v280
      %vm283 = vcmp.lt.s32.totalorder %v225, 0
      %v284 = vsub.s32 0, %v225
      %v285 = vsel %vm283, %v284, %v225
      %v286 = vshrl.u32 %v285, 6
      %v287 = vand.u32 %v285, 63
      %v288 = vsub.s32 0, %v287
      %v289 = vsel %vm283, %v288, %v287
      %vm290 = vcmp.lt.s32.totalorder %v226, 0
      %v291 = vsub.s32 0, %v226
      %v292 = vsel %vm290, %v291, %v226
      %v293 = vshrl.u32 %v292, 6
      %v294 = vand.u32 %v292, 63
      %v295 = vsub.s32 0, %v294
      %v296 = vsel %vm290, %v295, %v294
      %vm297 = vcmp.lt.s32.totalorder %v227, 0
      %v298 = vsub.s32 0, %v227
      %v299 = vsel %vm297, %v298, %v227
      %v300 = vshrl.u32 %v299, 6
      %v301 = vand.u32 %v299, 63
      %v302 = vsub.s32 0, %v301
      %v303 = vsel %vm297, %v302, %v301
      %vm304 = vcmp.lt.s32.totalorder %v228, 0
      %v305 = vsub.s32 0, %v228
      %v306 = vsel %vm304, %v305, %v228
      %v307 = vshrl.u32 %v306, 6
      %v308 = vand.u32 %v306, 63
      %v309 = vsub.s32 0, %v308
      %v310 = vsel %vm304, %v309, %v308
      %vm311 = vcmp.lt.s32.totalorder %v229, 0
      %v312 = vsub.s32 0, %v229
      %v313 = vsel %vm311, %v312, %v229
      %v314 = vshrl.u32 %v313, 6
      %v315 = vand.u32 %v313, 63
      %v316 = vsub.s32 0, %v315
      %v317 = vsel %vm311, %v316, %v315
      %vm318 = vcmp.lt.s32.totalorder %v230, 0
      %v319 = vsub.s32 0, %v230
      %v320 = vsel %vm318, %v319, %v230
      %v321 = vshrl.u32 %v320, 6
      %v322 = vand.u32 %v320, 63
      %v323 = vsub.s32 0, %v322
      %v324 = vsel %vm318, %v323, %v322
      %vm325 = vcmp.lt.s32.totalorder %v231, 0
      %v326 = vsub.s32 0, %v231
      %v327 = vsel %vm325, %v326, %v231
      %v328 = vshrl.u32 %v327, 6
      %v329 = vand.u32 %v327, 63
      %v330 = vsub.s32 0, %v329
      %v331 = vsel %vm325, %v330, %v329
      %vm332 = vcmp.lt.s32.totalorder %v232, 0
      %v333 = vsub.s32 0, %v232
      %v334 = vsel %vm332, %v333, %v232
      %v335 = vshrl.u32 %v334, 6
      %v336 = vand.u32 %v334, 63
      %v337 = vsub.s32 0, %v336
      %v338 = vsel %vm332, %v337, %v336
      %vm339 = vcmp.lt.s32.totalorder %v233, 0
      %v340 = vsub.s32 0, %v233
      %v341 = vsel %vm339, %v340, %v233
      %v342 = vshrl.u32 %v341, 6
      %v343 = vand.u32 %v341, 63
      %v344 = vsub.s32 0, %v343
      %v345 = vsel %vm339, %v344, %v343
      %vm346 = vcmp.ne.s32.totalorder %v240, 0
      %vm347 = vcmp.ne.s32.totalorder %v247, 0
      %vm348 = vcmp.ne.s32.totalorder %v254, 0
      %vm349 = vcmp.ne.s32.totalorder %v261, 0
      %vm350 = vcmp.ne.s32.totalorder %v268, 0
      %vm351 = vcmp.ne.s32.totalorder %v275, 0
      %vm352 = vcmp.ne.s32.totalorder %v282, 0
      %vm353 = vcmp.ne.s32.totalorder %v289, 0
      %vm354 = vcmp.ne.s32.totalorder %v296, 0
      %vm355 = vcmp.ne.s32.totalorder %v303, 0
      %vm356 = vcmp.ne.s32.totalorder %v310, 0
      %vm357 = vcmp.ne.s32.totalorder %v317, 0
      %vm358 = vcmp.ne.s32.totalorder %v324, 0
      %vm359 = vcmp.ne.s32.totalorder %v331, 0
      %vm360 = vcmp.ne.s32.totalorder %v338, 0
      %vm361 = vcmp.ne.s32.totalorder %v345, 0
      %vm362 = vcmp.lt.s32.totalorder %v240, 0
      %vm363 = vcmp.lt.s32.totalorder %v247, 0
      %vm364 = vcmp.lt.s32.totalorder %v254, 0
      %vm365 = vcmp.lt.s32.totalorder %v261, 0
      %vm366 = vcmp.lt.s32.totalorder %v268, 0
      %vm367 = vcmp.lt.s32.totalorder %v275, 0
      %vm368 = vcmp.lt.s32.totalorder %v282, 0
      %vm369 = vcmp.lt.s32.totalorder %v289, 0
      %vm370 = vcmp.lt.s32.totalorder %v296, 0
      %vm371 = vcmp.lt.s32.totalorder %v303, 0
      %vm372 = vcmp.lt.s32.totalorder %v310, 0
      %vm373 = vcmp.lt.s32.totalorder %v317, 0
      %vm374 = vcmp.lt.s32.totalorder %v324, 0
      %vm375 = vcmp.lt.s32.totalorder %v331, 0
      %vm376 = vcmp.lt.s32.totalorder %v338, 0
      %vm377 = vcmp.lt.s32.totalorder %v345, 0
      %vm378 = vmand %vm362, %vm346
      %vm379 = vmand %vm363, %vm347
      %vm380 = vmand %vm364, %vm348
      %vm381 = vmand %vm365, %vm349
      %vm382 = vmand %vm366, %vm350
      %vm383 = vmand %vm367, %vm351
      %vm384 = vmand %vm368, %vm352
      %vm385 = vmand %vm369, %vm353
      %vm386 = vmand %vm370, %vm354
      %vm387 = vmand %vm371, %vm355
      %vm388 = vmand %vm372, %vm356
      %vm389 = vmand %vm373, %vm357
      %vm390 = vmand %vm374, %vm358
      %vm391 = vmand %vm375, %vm359
      %vm392 = vmand %vm376, %vm360
      %vm393 = vmand %vm377, %vm361
      %v394 = vadd.s32 %v240, 64
      %v395 = vadd.s32 %v247, 64
      %v396 = vadd.s32 %v254, 64
      %v397 = vadd.s32 %v261, 64
      %v398 = vadd.s32 %v268, 64
      %v399 = vadd.s32 %v275, 64
      %v400 = vadd.s32 %v282, 64
      %v401 = vadd.s32 %v289, 64
      %v402 = vadd.s32 %v296, 64
      %v403 = vadd.s32 %v303, 64
      %v404 = vadd.s32 %v310, 64
      %v405 = vadd.s32 %v317, 64
      %v406 = vadd.s32 %v324, 64
      %v407 = vadd.s32 %v331, 64
      %v408 = vadd.s32 %v338, 64
      %v409 = vadd.s32 %v345, 64
      %v410 = vsel %vm378, %v394, %v240
      %v411 = vsel %vm379, %v395, %v247
      %v412 = vsel %vm380, %v396, %v254
      %v413 = vsel %vm381, %v397, %v261
      %v414 = vsel %vm382, %v398, %v268
      %v415 = vsel %vm383, %v399, %v275
      %v416 = vsel %vm384, %v400, %v282
      %v417 = vsel %vm385, %v401, %v289
      %v418 = vsel %vm386, %v402, %v296
      %v419 = vsel %vm387, %v403, %v303
      %v420 = vsel %vm388, %v404, %v310
      %v421 = vsel %vm389, %v405, %v317
      %v422 = vsel %vm390, %v406, %v324
      %v423 = vsel %vm391, %v407, %v331
      %v424 = vsel %vm392, %v408, %v338
      %v425 = vsel %vm393, %v409, %v345
      %vm426 = vcmp.ge.s32.totalorder %v410, 1
      %vm427 = vcmp.ge.s32.totalorder %v411, 1
      %vm428 = vcmp.ge.s32.totalorder %v412, 1
      %vm429 = vcmp.ge.s32.totalorder %v413, 1
      %vm430 = vcmp.ge.s32.totalorder %v414, 1
      %vm431 = vcmp.ge.s32.totalorder %v415, 1
      %vm432 = vcmp.ge.s32.totalorder %v416, 1
      %vm433 = vcmp.ge.s32.totalorder %v417, 1
      %vm434 = vcmp.ge.s32.totalorder %v418, 1
      %vm435 = vcmp.ge.s32.totalorder %v419, 1
      %vm436 = vcmp.ge.s32.totalorder %v420, 1
      %vm437 = vcmp.ge.s32.totalorder %v421, 1
      %vm438 = vcmp.ge.s32.totalorder %v422, 1
      %vm439 = vcmp.ge.s32.totalorder %v423, 1
      %vm440 = vcmp.ge.s32.totalorder %v424, 1
      %vm441 = vcmp.ge.s32.totalorder %v425, 1
      %vm442 = vcmp.lt.s32.totalorder %v410, 63
      %vm443 = vcmp.lt.s32.totalorder %v411, 63
      %vm444 = vcmp.lt.s32.totalorder %v412, 63
      %vm445 = vcmp.lt.s32.totalorder %v413, 63
      %vm446 = vcmp.lt.s32.totalorder %v414, 63
      %vm447 = vcmp.lt.s32.totalorder %v415, 63
      %vm448 = vcmp.lt.s32.totalorder %v416, 63
      %vm449 = vcmp.lt.s32.totalorder %v417, 63
      %vm450 = vcmp.lt.s32.totalorder %v418, 63
      %vm451 = vcmp.lt.s32.totalorder %v419, 63
      %vm452 = vcmp.lt.s32.totalorder %v420, 63
      %vm453 = vcmp.lt.s32.totalorder %v421, 63
      %vm454 = vcmp.lt.s32.totalorder %v422, 63
      %vm455 = vcmp.lt.s32.totalorder %v423, 63
      %vm456 = vcmp.lt.s32.totalorder %v424, 63
      %vm457 = vcmp.lt.s32.totalorder %v425, 63
      %v458 = vld [vmem:[%s1] sm:$0xff]
      %v459 = vld [vmem:[%s1 + $0x8] sm:$0xff]
      %v460 = vld [vmem:[%s1 + $0x10] sm:$0xff]
      %v461 = vld [vmem:[%s3] sm:$0x1]
      %v462 = vlaneseq
      %v463 = vshrl.u32 %v462, 7
      %v464 = vsub.s32 0, %v463
      %v465 = vrot.slane %v461, %v464
      %vm466 = vcmask 195584
      %v468 = vsel %vm466, %v201, 0
      %v471 = vsel %vm466, %v202, 0
      %v474 = vsel %vm466, %v203, 0
      %v477 = vsel %vm466, %v204, 0
      %v480 = vsel %vm466, %v205, 0
      %v483 = vsel %vm466, %v206, 0
      %v486 = vsel %vm466, %v207, 0
      %v489 = vsel %vm466, %v208, 0
      %v492 = vsel %vm466, %v209, 0
      %v495 = vsel %vm466, %v210, 0
      %v498 = vsel %vm466, %v211, 0
      %v501 = vsel %vm466, %v212, 0
      %v504 = vsel %vm466, %v213, 0
      %v507 = vsel %vm466, %v214, 0
      %v510 = vsel %vm466, %v215, 0
      %v513 = vsel %vm466, %v216, 0
      %515 = vmatprep.subr.mxu0 0.0
      %516 = vmatpush1.msra.mxu0 0.0
      %517 = vmatprep.subr.mxu0 0.0
      %518 = vmatpush1.msra.mxu0 0.0
      %519 = vmatprep.subr.mxu0 0.0
      %520 = vmatpush1.msra.mxu0 0.0
      %521 = vmatprep.subr.mxu0 0.0
      %522 = vmatpush1.msra.mxu0 0.0
      %523 = vmatprep.subr.mxu0 0.0
      %524 = vmatpush1.msra.mxu0 0.0
      %525 = vmatprep.subr.mxu0 0.0
      %526 = vmatpush1.msra.mxu0 0.0
      %527 = vmatprep.subr.mxu0 0.0
      %528 = vmatpush1.msra.mxu0 0.0
      %529 = vmatprep.subr.mxu0 0.0
      %530 = vmatpush1.msra.mxu0 0.0
      %531 = vmatprep.subr.mxu0 0.0
      %532 = vmatpush1.msra.mxu0 0.0
      %533 = vmatprep.subr.mxu0 0.0
      %534 = vmatpush1.msra.mxu0 0.0
      %535 = vmatprep.subr.mxu0 0.0
      %536 = vmatpush1.msra.mxu0 0.0
      %537 = vmatprep.subr.mxu0 0.0
      %538 = vmatpush1.msra.mxu0 0.0
      %539 = vmatprep.subr.mxu0 0.0
      %540 = vmatpush1.msra.mxu0 0.0
      %541 = vmatprep.subr.mxu0 0.0
      %542 = vmatpush1.msra.mxu0 %v460
      %543 = vmatprep.subr.mxu0 0.0
      %544 = vmatpush1.msra.mxu0 %v459
      %545 = vmatprep.subr.mxu0 0.0
      %546 = vmatpush1.msra.mxu0 %v458
      %547 = vmatprep.subr.mxu0 0.0
      %548 = vmatpush2.msra.mxu0 0.0
      %549 = vmatprep.subr.mxu0 0.0
      %550 = vmatpush2.msra.mxu0 0.0
      %551 = vmatprep.subr.mxu0 0.0
      %552 = vmatpush2.msra.mxu0 0.0
      %553 = vmatprep.subr.mxu0 0.0
      %554 = vmatpush2.msra.mxu0 0.0
      %555 = vmatprep.subr.mxu0 0.0
      %556 = vmatpush2.msra.mxu0 0.0
      %557 = vmatprep.subr.mxu0 0.0
      %558 = vmatpush2.msra.mxu0 0.0
      %559 = vmatprep.subr.mxu0 0.0
      %560 = vmatpush2.msra.mxu0 0.0
      %561 = vmatprep.subr.mxu0 0.0
      %562 = vmatpush2.msra.mxu0 0.0
      %563 = vmatprep.subr.mxu0 0.0
      %564 = vmatpush2.msra.mxu0 0.0
      %565 = vmatprep.subr.mxu0 0.0
      %566 = vmatpush2.msra.mxu0 0.0
      %567 = vmatprep.subr.mxu0 0.0
      %568 = vmatpush2.msra.mxu0 0.0
      %569 = vmatprep.subr.mxu0 0.0
      %570 = vmatpush2.msra.mxu0 0.0
      %571 = vmatprep.subr.mxu0 0.0
      %572 = vmatpush2.msra.mxu0 0.0
      %573 = vmatprep.subr.mxu0 0.0
      %574 = vmatpush2.msra.mxu0 0.0
      %575 = vmatprep.subr.mxu0 0.0
      %576 = vmatpush2.msra.mxu0 0.0
      %577 = vmatprep.subr.mxu0 0.0
      %578 = vmatpush2.msra.mxu0 0.0
      %579 = vmatprep.mubr.f32.mxu0 0.0
      %580 = vmatmul.mubr.f32.gmra.mxu0 %v468
      %v581 = vpop.f32.mrf.mxu0
      %v582 = vadd.f32 %v465, %v581
      %v583 = vpop.f32.mrf.mxu0
      %584 = vmatprep.mubr.f32.mxu0 0.0
      %585 = vmatmul.mubr.f32.gmra.mxu0 %v471
      %v586 = vpop.f32.mrf.mxu0
      %v587 = vadd.f32 %v465, %v586
      %v588 = vpop.f32.mrf.mxu0
      %589 = vmatprep.mubr.f32.mxu0 0.0
      %590 = vmatmul.mubr.f32.gmra.mxu0 %v474
      %v591 = vpop.f32.mrf.mxu0
      %v592 = vadd.f32 %v465, %v591
      %v593 = vpop.f32.mrf.mxu0
      %594 = vmatprep.mubr.f32.mxu0 0.0
      %595 = vmatmul.mubr.f32.gmra.mxu0 %v477
      %v596 = vpop.f32.mrf.mxu0
      %v597 = vadd.f32 %v465, %v596
      %v598 = vpop.f32.mrf.mxu0
      %599 = vmatprep.mubr.f32.mxu0 0.0
      %600 = vmatmul.mubr.f32.gmra.mxu0 %v480
      %v601 = vpop.f32.mrf.mxu0
      %v602 = vadd.f32 %v465, %v601
      %v603 = vpop.f32.mrf.mxu0
      %604 = vmatprep.mubr.f32.mxu0 0.0
      %605 = vmatmul.mubr.f32.gmra.mxu0 %v483
      %v606 = vpop.f32.mrf.mxu0
      %v607 = vadd.f32 %v465, %v606
      %v608 = vpop.f32.mrf.mxu0
      %609 = vmatprep.mubr.f32.mxu0 0.0
      %610 = vmatmul.mubr.f32.gmra.mxu0 %v486
      %v611 = vpop.f32.mrf.mxu0
      %v612 = vadd.f32 %v465, %v611
      %v613 = vpop.f32.mrf.mxu0
      %614 = vmatprep.mubr.f32.mxu0 0.0
      %615 = vmatmul.mubr.f32.gmra.mxu0 %v489
      %v616 = vpop.f32.mrf.mxu0
      %v617 = vadd.f32 %v465, %v616
      %v618 = vpop.f32.mrf.mxu0
      %619 = vmatprep.mubr.f32.mxu0 0.0
      %620 = vmatmul.mubr.f32.gmra.mxu0 %v492
      %v621 = vpop.f32.mrf.mxu0
      %v622 = vadd.f32 %v465, %v621
      %v623 = vpop.f32.mrf.mxu0
      %624 = vmatprep.mubr.f32.mxu0 0.0
      %625 = vmatmul.mubr.f32.gmra.mxu0 %v495
      %v626 = vpop.f32.mrf.mxu0
      %v627 = vadd.f32 %v465, %v626
      %v628 = vpop.f32.mrf.mxu0
      %629 = vmatprep.mubr.f32.mxu0 0.0
      %630 = vmatmul.mubr.f32.gmra.mxu0 %v498
      %v631 = vpop.f32.mrf.mxu0
      %v632 = vadd.f32 %v465, %v631
      %v633 = vpop.f32.mrf.mxu0
      %634 = vmatprep.mubr.f32.mxu0 0.0
      %635 = vmatmul.mubr.f32.gmra.mxu0 %v501
      %v636 = vpop.f32.mrf.mxu0
      %v637 = vadd.f32 %v465, %v636
      %v638 = vpop.f32.mrf.mxu0
      %639 = vmatprep.mubr.f32.mxu0 0.0
      %640 = vmatmul.mubr.f32.gmra.mxu0 %v504
      %v641 = vpop.f32.mrf.mxu0
      %v642 = vadd.f32 %v465, %v641
      %v643 = vpop.f32.mrf.mxu0
      %644 = vmatprep.mubr.f32.mxu0 0.0
      %645 = vmatmul.mubr.f32.gmra.mxu0 %v507
      %v646 = vpop.f32.mrf.mxu0
      %v647 = vadd.f32 %v465, %v646
      %v648 = vpop.f32.mrf.mxu0
      %649 = vmatprep.mubr.f32.mxu0 0.0
      %650 = vmatmul.mubr.f32.gmra.mxu0 %v510
      %v651 = vpop.f32.mrf.mxu0
      %v652 = vadd.f32 %v465, %v651
      %v653 = vpop.f32.mrf.mxu0
      %654 = vmatprep.mubr.f32.mxu0 0.0
      %655 = vmatmul.mubr.f32.gmra.mxu0 %v513
      %v656 = vpop.f32.mrf.mxu0
      %v657 = vadd.f32 %v465, %v656
      %v658 = vpop.f32.mrf.mxu0
      %659 = vdwg.mxu0
      %v660 = vmax.f32 %v582, 0.0
      %v661 = vmax.f32 %v587, 0.0
      %v662 = vmax.f32 %v592, 0.0
      %v663 = vmax.f32 %v597, 0.0
      %v664 = vmax.f32 %v602, 0.0
      %v665 = vmax.f32 %v607, 0.0
      %v666 = vmax.f32 %v612, 0.0
      %v667 = vmax.f32 %v617, 0.0
      %v668 = vmax.f32 %v622, 0.0
      %v669 = vmax.f32 %v627, 0.0
      %v670 = vmax.f32 %v632, 0.0
      %v671 = vmax.f32 %v637, 0.0
      %v672 = vmax.f32 %v642, 0.0
      %v673 = vmax.f32 %v647, 0.0
      %v674 = vmax.f32 %v652, 0.0
      %v675 = vmax.f32 %v657, 0.0
      %v676 = vrot.slane %v660, 7
      %v677 = vrot.slane %v661, 7
      %v678 = vrot.slane %v662, 7
      %v679 = vrot.slane %v663, 7
      %v680 = vrot.slane %v664, 7
      %v681 = vrot.slane %v665, 7
      %v682 = vrot.slane %v666, 7
      %v683 = vrot.slane %v667, 7
      %v684 = vrot.slane %v668, 7
      %v685 = vrot.slane %v669, 7
      %v686 = vrot.slane %v670, 7
      %v687 = vrot.slane %v671, 7
      %v688 = vrot.slane %v672, 7
      %v689 = vrot.slane %v673, 7
      %v690 = vrot.slane %v674, 7
      %v691 = vrot.slane %v675, 7
      %vm692 = vcmp.lt.s32.totalorder %v218, 1
      %v693 = vsel %vm692, %v690, %v691
      %v694 = vsel %vm692, %v689, %v690
      %v695 = vsel %vm692, %v688, %v689
      %v696 = vsel %vm692, %v687, %v688
      %v697 = vsel %vm692, %v686, %v687
      %v698 = vsel %vm692, %v685, %v686
      %v699 = vsel %vm692, %v684, %v685
      %v700 = vsel %vm692, %v683, %v684
      %v701 = vsel %vm692, %v682, %v683
      %v702 = vsel %vm692, %v681, %v682
      %v703 = vsel %vm692, %v680, %v681
      %v704 = vsel %vm692, %v679, %v680
      %v705 = vsel %vm692, %v678, %v679
      %v706 = vsel %vm692, %v677, %v678
      %v707 = vsel %vm692, %v676, %v677
      %v708 = vsel %vm692, %v691, %v676
      %v709 = vsel %vm426, 1, 0
      %v710 = vsel %vm427, 1, 0
      %v711 = vsel %vm428, 1, 0
      %v712 = vsel %vm429, 1, 0
      %v713 = vsel %vm430, 1, 0
      %v714 = vsel %vm431, 1, 0
      %v715 = vsel %vm432, 1, 0
      %v716 = vsel %vm433, 1, 0
      %v717 = vsel %vm434, 1, 0
      %v718 = vsel %vm435, 1, 0
      %v719 = vsel %vm436, 1, 0
      %v720 = vsel %vm437, 1, 0
      %v721 = vsel %vm438, 1, 0
      %v722 = vsel %vm439, 1, 0
      %v723 = vsel %vm440, 1, 0
      %v724 = vsel %vm441, 1, 0
      %vm725 = vcmp.eq.s32.totalorder %v709, 1
      %vm726 = vcmp.eq.s32.totalorder %v710, 1
      %vm727 = vcmp.eq.s32.totalorder %v711, 1
      %vm728 = vcmp.eq.s32.totalorder %v712, 1
      %vm729 = vcmp.eq.s32.totalorder %v713, 1
      %vm730 = vcmp.eq.s32.totalorder %v714, 1
      %vm731 = vcmp.eq.s32.totalorder %v715, 1
      %vm732 = vcmp.eq.s32.totalorder %v716, 1
      %vm733 = vcmp.eq.s32.totalorder %v717, 1
      %vm734 = vcmp.eq.s32.totalorder %v718, 1
      %vm735 = vcmp.eq.s32.totalorder %v719, 1
      %vm736 = vcmp.eq.s32.totalorder %v720, 1
      %vm737 = vcmp.eq.s32.totalorder %v721, 1
      %vm738 = vcmp.eq.s32.totalorder %v722, 1
      %vm739 = vcmp.eq.s32.totalorder %v723, 1
      %vm740 = vcmp.eq.s32.totalorder %v724, 1
      %v741 = vsel %vm725, %v708, 0.0
      %v742 = vsel %vm726, %v707, 0.0
      %v743 = vsel %vm727, %v706, 0.0
      %v744 = vsel %vm728, %v705, 0.0
      %v745 = vsel %vm729, %v704, 0.0
      %v746 = vsel %vm730, %v703, 0.0
      %v747 = vsel %vm731, %v702, 0.0
      %v748 = vsel %vm732, %v701, 0.0
      %v749 = vsel %vm733, %v700, 0.0
      %v750 = vsel %vm734, %v699, 0.0
      %v751 = vsel %vm735, %v698, 0.0
      %v752 = vsel %vm736, %v697, 0.0
      %v753 = vsel %vm737, %v696, 0.0
      %v754 = vsel %vm738, %v695, 0.0
      %v755 = vsel %vm739, %v694, 0.0
      %v756 = vsel %vm740, %v693, 0.0
      %v757 = vrot.slane %v660, 1
      %v758 = vrot.slane %v661, 1
      %v759 = vrot.slane %v662, 1
      %v760 = vrot.slane %v663, 1
      %v761 = vrot.slane %v664, 1
      %v762 = vrot.slane %v665, 1
      %v763 = vrot.slane %v666, 1
      %v764 = vrot.slane %v667, 1
      %v765 = vrot.slane %v668, 1
      %v766 = vrot.slane %v669, 1
      %v767 = vrot.slane %v670, 1
      %v768 = vrot.slane %v671, 1
      %v769 = vrot.slane %v672, 1
      %v770 = vrot.slane %v673, 1
      %v771 = vrot.slane %v674, 1
      %v772 = vrot.slane %v675, 1
      %vm773 = vcmp.lt.s32.totalorder %v218, 7
      %v774 = vsel %vm773, %v771, %v772
      %v775 = vsel %vm773, %v770, %v771
      %v776 = vsel %vm773, %v769, %v770
      %v777 = vsel %vm773, %v768, %v769
      %v778 = vsel %vm773, %v767, %v768
      %v779 = vsel %vm773, %v766, %v767
      %v780 = vsel %vm773, %v765, %v766
      %v781 = vsel %vm773, %v764, %v765
      %v782 = vsel %vm773, %v763, %v764
      %v783 = vsel %vm773, %v762, %v763
      %v784 = vsel %vm773, %v761, %v762
      %v785 = vsel %vm773, %v760, %v761
      %v786 = vsel %vm773, %v759, %v760
      %v787 = vsel %vm773, %v758, %v759
      %v788 = vsel %vm773, %v757, %v758
      %v789 = vsel %vm773, %v772, %v757
      %v790 = vsel %vm442, 1, 0
      %v791 = vsel %vm443, 1, 0
      %v792 = vsel %vm444, 1, 0
      %v793 = vsel %vm445, 1, 0
      %v794 = vsel %vm446, 1, 0
      %v795 = vsel %vm447, 1, 0
      %v796 = vsel %vm448, 1, 0
      %v797 = vsel %vm449, 1, 0
      %v798 = vsel %vm450, 1, 0
      %v799 = vsel %vm451, 1, 0
      %v800 = vsel %vm452, 1, 0
      %v801 = vsel %vm453, 1, 0
      %v802 = vsel %vm454, 1, 0
      %v803 = vsel %vm455, 1, 0
      %v804 = vsel %vm456, 1, 0
      %v805 = vsel %vm457, 1, 0
      %vm806 = vcmp.eq.s32.totalorder %v790, 1
      %vm807 = vcmp.eq.s32.totalorder %v791, 1
      %vm808 = vcmp.eq.s32.totalorder %v792, 1
      %vm809 = vcmp.eq.s32.totalorder %v793, 1
      %vm810 = vcmp.eq.s32.totalorder %v794, 1
      %vm811 = vcmp.eq.s32.totalorder %v795, 1
      %vm812 = vcmp.eq.s32.totalorder %v796, 1
      %vm813 = vcmp.eq.s32.totalorder %v797, 1
      %vm814 = vcmp.eq.s32.totalorder %v798, 1
      %vm815 = vcmp.eq.s32.totalorder %v799, 1
      %vm816 = vcmp.eq.s32.totalorder %v800, 1
      %vm817 = vcmp.eq.s32.totalorder %v801, 1
      %vm818 = vcmp.eq.s32.totalorder %v802, 1
      %vm819 = vcmp.eq.s32.totalorder %v803, 1
      %vm820 = vcmp.eq.s32.totalorder %v804, 1
      %vm821 = vcmp.eq.s32.totalorder %v805, 1
      %v822 = vsel %vm806, %v788, 0.0
      %v823 = vsel %vm807, %v787, 0.0
      %v824 = vsel %vm808, %v786, 0.0
      %v825 = vsel %vm809, %v785, 0.0
      %v826 = vsel %vm810, %v784, 0.0
      %v827 = vsel %vm811, %v783, 0.0
      %v828 = vsel %vm812, %v782, 0.0
      %v829 = vsel %vm813, %v781, 0.0
      %v830 = vsel %vm814, %v780, 0.0
      %v831 = vsel %vm815, %v779, 0.0
      %v832 = vsel %vm816, %v778, 0.0
      %v833 = vsel %vm817, %v777, 0.0
      %v834 = vsel %vm818, %v776, 0.0
      %v835 = vsel %vm819, %v775, 0.0
      %v836 = vsel %vm820, %v774, 0.0
      %v837 = vsel %vm821, %v789, 0.0
      %v838 = vld [vmem:[%s2] sm:$0xff]
      %v839 = vld [vmem:[%s2 + $0x8] sm:$0xff]
      %v840 = vld [vmem:[%s2 + $0x10] sm:$0xff]
      %s841 = scalar_lea.vmem %s2, 24
      %v842 = vld [vmem:[%s841] sm:$0xff]
      %v843 = vld [vmem:[%s841 + $0x8] sm:$0xff]
      %v844 = vld [vmem:[%s841 + $0x10] sm:$0xff]
      %v846 = vsel %vm466, %v660, 0
      %v849 = vsel %vm466, %v661, 0
      %v852 = vsel %vm466, %v662, 0
      %v855 = vsel %vm466, %v663, 0
      %v858 = vsel %vm466, %v664, 0
      %v861 = vsel %vm466, %v665, 0
      %v864 = vsel %vm466, %v666, 0
      %v867 = vsel %vm466, %v667, 0
      %v870 = vsel %vm466, %v668, 0
      %v873 = vsel %vm466, %v669, 0
      %v876 = vsel %vm466, %v670, 0
      %v879 = vsel %vm466, %v671, 0
      %v882 = vsel %vm466, %v672, 0
      %v885 = vsel %vm466, %v673, 0
      %v888 = vsel %vm466, %v674, 0
      %v891 = vsel %vm466, %v675, 0
      %893 = vmatprep.subr.mxu0 0.0
      %894 = vmatpush1.msra.mxu0 0.0
      %895 = vmatprep.subr.mxu0 0.0
      %896 = vmatpush1.msra.mxu0 0.0
      %897 = vmatprep.subr.mxu0 0.0
      %898 = vmatpush1.msra.mxu0 0.0
      %899 = vmatprep.subr.mxu0 0.0
      %900 = vmatpush1.msra.mxu0 0.0
      %901 = vmatprep.subr.mxu0 0.0
      %902 = vmatpush1.msra.mxu0 0.0
      %903 = vmatprep.subr.mxu0 0.0
      %904 = vmatpush1.msra.mxu0 0.0
      %905 = vmatprep.subr.mxu0 0.0
      %906 = vmatpush1.msra.mxu0 0.0
      %907 = vmatprep.subr.mxu0 0.0
      %908 = vmatpush1.msra.mxu0 0.0
      %909 = vmatprep.subr.mxu0 0.0
      %910 = vmatpush1.msra.mxu0 0.0
      %911 = vmatprep.subr.mxu0 0.0
      %912 = vmatpush1.msra.mxu0 0.0
      %913 = vmatprep.subr.mxu0 0.0
      %914 = vmatpush1.msra.mxu0 0.0
      %915 = vmatprep.subr.mxu0 0.0
      %916 = vmatpush1.msra.mxu0 0.0
      %917 = vmatprep.subr.mxu0 0.0
      %918 = vmatpush1.msra.mxu0 0.0
      %919 = vmatprep.subr.mxu0 0.0
      %920 = vmatpush1.msra.mxu0 %v844
      %921 = vmatprep.subr.mxu0 0.0
      %922 = vmatpush1.msra.mxu0 %v843
      %923 = vmatprep.subr.mxu0 0.0
      %924 = vmatpush1.msra.mxu0 %v842
      %925 = vmatprep.subr.mxu0 0.0
      %926 = vmatpush2.msra.mxu0 0.0
      %927 = vmatprep.subr.mxu0 0.0
      %928 = vmatpush2.msra.mxu0 0.0
      %929 = vmatprep.subr.mxu0 0.0
      %930 = vmatpush2.msra.mxu0 0.0
      %931 = vmatprep.subr.mxu0 0.0
      %932 = vmatpush2.msra.mxu0 0.0
      %933 = vmatprep.subr.mxu0 0.0
      %934 = vmatpush2.msra.mxu0 0.0
      %935 = vmatprep.subr.mxu0 0.0
      %936 = vmatpush2.msra.mxu0 0.0
      %937 = vmatprep.subr.mxu0 0.0
      %938 = vmatpush2.msra.mxu0 0.0
      %939 = vmatprep.subr.mxu0 0.0
      %940 = vmatpush2.msra.mxu0 0.0
      %941 = vmatprep.subr.mxu0 0.0
      %942 = vmatpush2.msra.mxu0 0.0
      %943 = vmatprep.subr.mxu0 0.0
      %944 = vmatpush2.msra.mxu0 0.0
      %945 = vmatprep.subr.mxu0 0.0
      %946 = vmatpush2.msra.mxu0 0.0
      %947 = vmatprep.subr.mxu0 0.0
      %948 = vmatpush2.msra.mxu0 0.0
      %949 = vmatprep.subr.mxu0 0.0
      %950 = vmatpush2.msra.mxu0 0.0
      %951 = vmatprep.subr.mxu0 0.0
      %952 = vmatpush2.msra.mxu0 0.0
      %953 = vmatprep.subr.mxu0 0.0
      %954 = vmatpush2.msra.mxu0 0.0
      %955 = vmatprep.subr.mxu0 0.0
      %956 = vmatpush2.msra.mxu0 0.0
      %957 = vmatprep.mubr.f32.mxu0 0.0
      %958 = vmatmul.mubr.f32.gmra.mxu0 %v846
      %v959 = vpop.f32.mrf.mxu0
      %v960 = vadd.f32 0.0, %v959
      %v961 = vpop.f32.mrf.mxu0
      %962 = vmatprep.mubr.f32.mxu0 0.0
      %963 = vmatmul.mubr.f32.gmra.mxu0 %v849
      %v964 = vpop.f32.mrf.mxu0
      %v965 = vadd.f32 0.0, %v964
      %v966 = vpop.f32.mrf.mxu0
      %967 = vmatprep.mubr.f32.mxu0 0.0
      %968 = vmatmul.mubr.f32.gmra.mxu0 %v852
      %v969 = vpop.f32.mrf.mxu0
      %v970 = vadd.f32 0.0, %v969
      %v971 = vpop.f32.mrf.mxu0
      %972 = vmatprep.mubr.f32.mxu0 0.0
      %973 = vmatmul.mubr.f32.gmra.mxu0 %v855
      %v974 = vpop.f32.mrf.mxu0
      %v975 = vadd.f32 0.0, %v974
      %v976 = vpop.f32.mrf.mxu0
      %977 = vmatprep.mubr.f32.mxu0 0.0
      %978 = vmatmul.mubr.f32.gmra.mxu0 %v858
      %v979 = vpop.f32.mrf.mxu0
      %v980 = vadd.f32 0.0, %v979
      %v981 = vpop.f32.mrf.mxu0
      %982 = vmatprep.mubr.f32.mxu0 0.0
      %983 = vmatmul.mubr.f32.gmra.mxu0 %v861
      %v984 = vpop.f32.mrf.mxu0
      %v985 = vadd.f32 0.0, %v984
      %v986 = vpop.f32.mrf.mxu0
      %987 = vmatprep.mubr.f32.mxu0 0.0
      %988 = vmatmul.mubr.f32.gmra.mxu0 %v864
      %v989 = vpop.f32.mrf.mxu0
      %v990 = vadd.f32 0.0, %v989
      %v991 = vpop.f32.mrf.mxu0
      %992 = vmatprep.mubr.f32.mxu0 0.0
      %993 = vmatmul.mubr.f32.gmra.mxu0 %v867
      %v994 = vpop.f32.mrf.mxu0
      %v995 = vadd.f32 0.0, %v994
      %v996 = vpop.f32.mrf.mxu0
      %997 = vmatprep.mubr.f32.mxu0 0.0
      %998 = vmatmul.mubr.f32.gmra.mxu0 %v870
      %v999 = vpop.f32.mrf.mxu0
      %v1000 = vadd.f32 0.0, %v999
      %v1001 = vpop.f32.mrf.mxu0
      %1002 = vmatprep.mubr.f32.mxu0 0.0
      %1003 = vmatmul.mubr.f32.gmra.mxu0 %v873
      %v1004 = vpop.f32.mrf.mxu0
      %v1005 = vadd.f32 0.0, %v1004
      %v1006 = vpop.f32.mrf.mxu0
      %1007 = vmatprep.mubr.f32.mxu0 0.0
      %1008 = vmatmul.mubr.f32.gmra.mxu0 %v876
      %v1009 = vpop.f32.mrf.mxu0
      %v1010 = vadd.f32 0.0, %v1009
      %v1011 = vpop.f32.mrf.mxu0
      %1012 = vmatprep.mubr.f32.mxu0 0.0
      %1013 = vmatmul.mubr.f32.gmra.mxu0 %v879
      %v1014 = vpop.f32.mrf.mxu0
      %v1015 = vadd.f32 0.0, %v1014
      %v1016 = vpop.f32.mrf.mxu0
      %1017 = vmatprep.mubr.f32.mxu0 0.0
      %1018 = vmatmul.mubr.f32.gmra.mxu0 %v882
      %v1019 = vpop.f32.mrf.mxu0
      %v1020 = vadd.f32 0.0, %v1019
      %v1021 = vpop.f32.mrf.mxu0
      %1022 = vmatprep.mubr.f32.mxu0 0.0
      %1023 = vmatmul.mubr.f32.gmra.mxu0 %v885
      %v1024 = vpop.f32.mrf.mxu0
      %v1025 = vadd.f32 0.0, %v1024
      %v1026 = vpop.f32.mrf.mxu0
      %1027 = vmatprep.mubr.f32.mxu0 0.0
      %1028 = vmatmul.mubr.f32.gmra.mxu0 %v888
      %v1029 = vpop.f32.mrf.mxu0
      %v1030 = vadd.f32 0.0, %v1029
      %v1031 = vpop.f32.mrf.mxu0
      %1032 = vmatprep.mubr.f32.mxu0 0.0
      %1033 = vmatmul.mubr.f32.gmra.mxu0 %v891
      %v1034 = vpop.f32.mrf.mxu0
      %v1035 = vadd.f32 0.0, %v1034
      %v1036 = vpop.f32.mrf.mxu0
      %1037 = vdwg.mxu0
      %v1039 = vsel %vm466, %v741, 0
      %v1042 = vsel %vm466, %v742, 0
      %v1045 = vsel %vm466, %v743, 0
      %v1048 = vsel %vm466, %v744, 0
      %v1051 = vsel %vm466, %v745, 0
      %v1054 = vsel %vm466, %v746, 0
      %v1057 = vsel %vm466, %v747, 0
      %v1060 = vsel %vm466, %v748, 0
      %v1063 = vsel %vm466, %v749, 0
      %v1066 = vsel %vm466, %v750, 0
      %v1069 = vsel %vm466, %v751, 0
      %v1072 = vsel %vm466, %v752, 0
      %v1075 = vsel %vm466, %v753, 0
      %v1078 = vsel %vm466, %v754, 0
      %v1081 = vsel %vm466, %v755, 0
      %v1084 = vsel %vm466, %v756, 0
      %1086 = vmatprep.subr.mxu0 0.0
      %1087 = vmatpush1.msra.mxu0 0.0
      %1088 = vmatprep.subr.mxu0 0.0
      %1089 = vmatpush1.msra.mxu0 0.0
      %1090 = vmatprep.subr.mxu0 0.0
      %1091 = vmatpush1.msra.mxu0 0.0
      %1092 = vmatprep.subr.mxu0 0.0
      %1093 = vmatpush1.msra.mxu0 0.0
      %1094 = vmatprep.subr.mxu0 0.0
      %1095 = vmatpush1.msra.mxu0 0.0
      %1096 = vmatprep.subr.mxu0 0.0
      %1097 = vmatpush1.msra.mxu0 0.0
      %1098 = vmatprep.subr.mxu0 0.0
      %1099 = vmatpush1.msra.mxu0 0.0
      %1100 = vmatprep.subr.mxu0 0.0
      %1101 = vmatpush1.msra.mxu0 0.0
      %1102 = vmatprep.subr.mxu0 0.0
      %1103 = vmatpush1.msra.mxu0 0.0
      %1104 = vmatprep.subr.mxu0 0.0
      %1105 = vmatpush1.msra.mxu0 0.0
      %1106 = vmatprep.subr.mxu0 0.0
      %1107 = vmatpush1.msra.mxu0 0.0
      %1108 = vmatprep.subr.mxu0 0.0
      %1109 = vmatpush1.msra.mxu0 0.0
      %1110 = vmatprep.subr.mxu0 0.0
      %1111 = vmatpush1.msra.mxu0 0.0
      %1112 = vmatprep.subr.mxu0 0.0
      %1113 = vmatpush1.msra.mxu0 %v840
      %1114 = vmatprep.subr.mxu0 0.0
      %1115 = vmatpush1.msra.mxu0 %v839
      %1116 = vmatprep.subr.mxu0 0.0
      %1117 = vmatpush1.msra.mxu0 %v838
      %1118 = vmatprep.subr.mxu0 0.0
      %1119 = vmatpush2.msra.mxu0 0.0
      %1120 = vmatprep.subr.mxu0 0.0
      %1121 = vmatpush2.msra.mxu0 0.0
      %1122 = vmatprep.subr.mxu0 0.0
      %1123 = vmatpush2.msra.mxu0 0.0
      %1124 = vmatprep.subr.mxu0 0.0
      %1125 = vmatpush2.msra.mxu0 0.0
      %1126 = vmatprep.subr.mxu0 0.0
      %1127 = vmatpush2.msra.mxu0 0.0
      %1128 = vmatprep.subr.mxu0 0.0
      %1129 = vmatpush2.msra.mxu0 0.0
      %1130 = vmatprep.subr.mxu0 0.0
      %1131 = vmatpush2.msra.mxu0 0.0
      %1132 = vmatprep.subr.mxu0 0.0
      %1133 = vmatpush2.msra.mxu0 0.0
      %1134 = vmatprep.subr.mxu0 0.0
      %1135 = vmatpush2.msra.mxu0 0.0
      %1136 = vmatprep.subr.mxu0 0.0
      %1137 = vmatpush2.msra.mxu0 0.0
      %1138 = vmatprep.subr.mxu0 0.0
      %1139 = vmatpush2.msra.mxu0 0.0
      %1140 = vmatprep.subr.mxu0 0.0
      %1141 = vmatpush2.msra.mxu0 0.0
      %1142 = vmatprep.subr.mxu0 0.0
      %1143 = vmatpush2.msra.mxu0 0.0
      %1144 = vmatprep.subr.mxu0 0.0
      %1145 = vmatpush2.msra.mxu0 0.0
      %1146 = vmatprep.subr.mxu0 0.0
      %1147 = vmatpush2.msra.mxu0 0.0
      %1148 = vmatprep.subr.mxu0 0.0
      %1149 = vmatpush2.msra.mxu0 0.0
      %1150 = vmatprep.mubr.f32.mxu0 0.0
      %1151 = vmatmul.mubr.f32.gmra.mxu0 %v1039
      %v1152 = vpop.f32.mrf.mxu0
      %v1153 = vadd.f32 %v960, %v1152
      %v1154 = vpop.f32.mrf.mxu0
      %1155 = vmatprep.mubr.f32.mxu0 0.0
      %1156 = vmatmul.mubr.f32.gmra.mxu0 %v1042
      %v1157 = vpop.f32.mrf.mxu0
      %v1158 = vadd.f32 %v965, %v1157
      %v1159 = vpop.f32.mrf.mxu0
      %1160 = vmatprep.mubr.f32.mxu0 0.0
      %1161 = vmatmul.mubr.f32.gmra.mxu0 %v1045
      %v1162 = vpop.f32.mrf.mxu0
      %v1163 = vadd.f32 %v970, %v1162
      %v1164 = vpop.f32.mrf.mxu0
      %1165 = vmatprep.mubr.f32.mxu0 0.0
      %1166 = vmatmul.mubr.f32.gmra.mxu0 %v1048
      %v1167 = vpop.f32.mrf.mxu0
      %v1168 = vadd.f32 %v975, %v1167
      %v1169 = vpop.f32.mrf.mxu0
      %1170 = vmatprep.mubr.f32.mxu0 0.0
      %1171 = vmatmul.mubr.f32.gmra.mxu0 %v1051
      %v1172 = vpop.f32.mrf.mxu0
      %v1173 = vadd.f32 %v980, %v1172
      %v1174 = vpop.f32.mrf.mxu0
      %1175 = vmatprep.mubr.f32.mxu0 0.0
      %1176 = vmatmul.mubr.f32.gmra.mxu0 %v1054
      %v1177 = vpop.f32.mrf.mxu0
      %v1178 = vadd.f32 %v985, %v1177
      %v1179 = vpop.f32.mrf.mxu0
      %1180 = vmatprep.mubr.f32.mxu0 0.0
      %1181 = vmatmul.mubr.f32.gmra.mxu0 %v1057
      %v1182 = vpop.f32.mrf.mxu0
      %v1183 = vadd.f32 %v990, %v1182
      %v1184 = vpop.f32.mrf.mxu0
      %1185 = vmatprep.mubr.f32.mxu0 0.0
      %1186 = vmatmul.mubr.f32.gmra.mxu0 %v1060
      %v1187 = vpop.f32.mrf.mxu0
      %v1188 = vadd.f32 %v995, %v1187
      %v1189 = vpop.f32.mrf.mxu0
      %1190 = vmatprep.mubr.f32.mxu0 0.0
      %1191 = vmatmul.mubr.f32.gmra.mxu0 %v1063
      %v1192 = vpop.f32.mrf.mxu0
      %v1193 = vadd.f32 %v1000, %v1192
      %v1194 = vpop.f32.mrf.mxu0
      %1195 = vmatprep.mubr.f32.mxu0 0.0
      %1196 = vmatmul.mubr.f32.gmra.mxu0 %v1066
      %v1197 = vpop.f32.mrf.mxu0
      %v1198 = vadd.f32 %v1005, %v1197
      %v1199 = vpop.f32.mrf.mxu0
      %1200 = vmatprep.mubr.f32.mxu0 0.0
      %1201 = vmatmul.mubr.f32.gmra.mxu0 %v1069
      %v1202 = vpop.f32.mrf.mxu0
      %v1203 = vadd.f32 %v1010, %v1202
      %v1204 = vpop.f32.mrf.mxu0
      %1205 = vmatprep.mubr.f32.mxu0 0.0
      %1206 = vmatmul.mubr.f32.gmra.mxu0 %v1072
      %v1207 = vpop.f32.mrf.mxu0
      %v1208 = vadd.f32 %v1015, %v1207
      %v1209 = vpop.f32.mrf.mxu0
      %1210 = vmatprep.mubr.f32.mxu0 0.0
      %1211 = vmatmul.mubr.f32.gmra.mxu0 %v1075
      %v1212 = vpop.f32.mrf.mxu0
      %v1213 = vadd.f32 %v1020, %v1212
      %v1214 = vpop.f32.mrf.mxu0
      %1215 = vmatprep.mubr.f32.mxu0 0.0
      %1216 = vmatmul.mubr.f32.gmra.mxu0 %v1078
      %v1217 = vpop.f32.mrf.mxu0
      %v1218 = vadd.f32 %v1025, %v1217
      %v1219 = vpop.f32.mrf.mxu0
      %1220 = vmatprep.mubr.f32.mxu0 0.0
      %1221 = vmatmul.mubr.f32.gmra.mxu0 %v1081
      %v1222 = vpop.f32.mrf.mxu0
      %v1223 = vadd.f32 %v1030, %v1222
      %v1224 = vpop.f32.mrf.mxu0
      %1225 = vmatprep.mubr.f32.mxu0 0.0
      %1226 = vmatmul.mubr.f32.gmra.mxu0 %v1084
      %v1227 = vpop.f32.mrf.mxu0
      %v1228 = vadd.f32 %v1035, %v1227
      %v1229 = vpop.f32.mrf.mxu0
      %1230 = vdwg.mxu0
      %s1231 = scalar_lea.vmem %s2, 48
      %v1232 = vld [vmem:[%s1231] sm:$0xff]
      %v1233 = vld [vmem:[%s1231 + $0x8] sm:$0xff]
      %v1234 = vld [vmem:[%s1231 + $0x10] sm:$0xff]
      %v1236 = vsel %vm466, %v822, 0
      %v1239 = vsel %vm466, %v823, 0
      %v1242 = vsel %vm466, %v824, 0
      %v1245 = vsel %vm466, %v825, 0
      %v1248 = vsel %vm466, %v826, 0
      %v1251 = vsel %vm466, %v827, 0
      %v1254 = vsel %vm466, %v828, 0
      %v1257 = vsel %vm466, %v829, 0
      %v1260 = vsel %vm466, %v830, 0
      %v1263 = vsel %vm466, %v831, 0
      %v1266 = vsel %vm466, %v832, 0
      %v1269 = vsel %vm466, %v833, 0
      %v1272 = vsel %vm466, %v834, 0
      %v1275 = vsel %vm466, %v835, 0
      %v1278 = vsel %vm466, %v836, 0
      %v1281 = vsel %vm466, %v837, 0
      %1283 = vmatprep.subr.mxu0 0.0
      %1284 = vmatpush1.msra.mxu0 0.0
      %1285 = vmatprep.subr.mxu0 0.0
      %1286 = vmatpush1.msra.mxu0 0.0
      %1287 = vmatprep.subr.mxu0 0.0
      %1288 = vmatpush1.msra.mxu0 0.0
      %1289 = vmatprep.subr.mxu0 0.0
      %1290 = vmatpush1.msra.mxu0 0.0
      %1291 = vmatprep.subr.mxu0 0.0
      %1292 = vmatpush1.msra.mxu0 0.0
      %1293 = vmatprep.subr.mxu0 0.0
      %1294 = vmatpush1.msra.mxu0 0.0
      %1295 = vmatprep.subr.mxu0 0.0
      %1296 = vmatpush1.msra.mxu0 0.0
      %1297 = vmatprep.subr.mxu0 0.0
      %1298 = vmatpush1.msra.mxu0 0.0
      %1299 = vmatprep.subr.mxu0 0.0
      %1300 = vmatpush1.msra.mxu0 0.0
      %1301 = vmatprep.subr.mxu0 0.0
      %1302 = vmatpush1.msra.mxu0 0.0
      %1303 = vmatprep.subr.mxu0 0.0
      %1304 = vmatpush1.msra.mxu0 0.0
      %1305 = vmatprep.subr.mxu0 0.0
      %1306 = vmatpush1.msra.mxu0 0.0
      %1307 = vmatprep.subr.mxu0 0.0
      %1308 = vmatpush1.msra.mxu0 0.0
      %1309 = vmatprep.subr.mxu0 0.0
      %1310 = vmatpush1.msra.mxu0 %v1234
      %1311 = vmatprep.subr.mxu0 0.0
      %1312 = vmatpush1.msra.mxu0 %v1233
      %1313 = vmatprep.subr.mxu0 0.0
      %1314 = vmatpush1.msra.mxu0 %v1232
      %1315 = vmatprep.subr.mxu0 0.0
      %1316 = vmatpush2.msra.mxu0 0.0
      %1317 = vmatprep.subr.mxu0 0.0
      %1318 = vmatpush2.msra.mxu0 0.0
      %1319 = vmatprep.subr.mxu0 0.0
      %1320 = vmatpush2.msra.mxu0 0.0
      %1321 = vmatprep.subr.mxu0 0.0
      %1322 = vmatpush2.msra.mxu0 0.0
      %1323 = vmatprep.subr.mxu0 0.0
      %1324 = vmatpush2.msra.mxu0 0.0
      %1325 = vmatprep.subr.mxu0 0.0
      %1326 = vmatpush2.msra.mxu0 0.0
      %1327 = vmatprep.subr.mxu0 0.0
      %1328 = vmatpush2.msra.mxu0 0.0
      %1329 = vmatprep.subr.mxu0 0.0
      %1330 = vmatpush2.msra.mxu0 0.0
      %1331 = vmatprep.subr.mxu0 0.0
      %1332 = vmatpush2.msra.mxu0 0.0
      %1333 = vmatprep.subr.mxu0 0.0
      %1334 = vmatpush2.msra.mxu0 0.0
      %1335 = vmatprep.subr.mxu0 0.0
      %1336 = vmatpush2.msra.mxu0 0.0
      %1337 = vmatprep.subr.mxu0 0.0
      %1338 = vmatpush2.msra.mxu0 0.0
      %1339 = vmatprep.subr.mxu0 0.0
      %1340 = vmatpush2.msra.mxu0 0.0
      %1341 = vmatprep.subr.mxu0 0.0
      %1342 = vmatpush2.msra.mxu0 0.0
      %1343 = vmatprep.subr.mxu0 0.0
      %1344 = vmatpush2.msra.mxu0 0.0
      %1345 = vmatprep.subr.mxu0 0.0
      %1346 = vmatpush2.msra.mxu0 0.0
      %1347 = vmatprep.mubr.f32.mxu0 0.0
      %1348 = vmatmul.mubr.f32.gmra.mxu0 %v1236
      %v1349 = vpop.f32.mrf.mxu0
      %v1350 = vadd.f32 0.0, %v1349
      %v1351 = vpop.f32.mrf.mxu0
      %1352 = vmatprep.mubr.f32.mxu0 0.0
      %1353 = vmatmul.mubr.f32.gmra.mxu0 %v1239
      %v1354 = vpop.f32.mrf.mxu0
      %v1355 = vadd.f32 0.0, %v1354
      %v1356 = vpop.f32.mrf.mxu0
      %1357 = vmatprep.mubr.f32.mxu0 0.0
      %1358 = vmatmul.mubr.f32.gmra.mxu0 %v1242
      %v1359 = vpop.f32.mrf.mxu0
      %v1360 = vadd.f32 0.0, %v1359
      %v1361 = vpop.f32.mrf.mxu0
      %1362 = vmatprep.mubr.f32.mxu0 0.0
      %1363 = vmatmul.mubr.f32.gmra.mxu0 %v1245
      %v1364 = vpop.f32.mrf.mxu0
      %v1365 = vadd.f32 0.0, %v1364
      %v1366 = vpop.f32.mrf.mxu0
      %1367 = vmatprep.mubr.f32.mxu0 0.0
      %1368 = vmatmul.mubr.f32.gmra.mxu0 %v1248
      %v1369 = vpop.f32.mrf.mxu0
      %v1370 = vadd.f32 0.0, %v1369
      %v1371 = vpop.f32.mrf.mxu0
      %1372 = vmatprep.mubr.f32.mxu0 0.0
      %1373 = vmatmul.mubr.f32.gmra.mxu0 %v1251
      %v1374 = vpop.f32.mrf.mxu0
      %v1375 = vadd.f32 0.0, %v1374
      %v1376 = vpop.f32.mrf.mxu0
      %1377 = vmatprep.mubr.f32.mxu0 0.0
      %1378 = vmatmul.mubr.f32.gmra.mxu0 %v1254
      %v1379 = vpop.f32.mrf.mxu0
      %v1380 = vadd.f32 0.0, %v1379
      %v1381 = vpop.f32.mrf.mxu0
      %1382 = vmatprep.mubr.f32.mxu0 0.0
      %1383 = vmatmul.mubr.f32.gmra.mxu0 %v1257
      %v1384 = vpop.f32.mrf.mxu0
      %v1385 = vadd.f32 0.0, %v1384
      %v1386 = vpop.f32.mrf.mxu0
      %1387 = vmatprep.mubr.f32.mxu0 0.0
      %1388 = vmatmul.mubr.f32.gmra.mxu0 %v1260
      %v1389 = vpop.f32.mrf.mxu0
      %v1390 = vadd.f32 0.0, %v1389
      %v1391 = vpop.f32.mrf.mxu0
      %1392 = vmatprep.mubr.f32.mxu0 0.0
      %1393 = vmatmul.mubr.f32.gmra.mxu0 %v1263
      %v1394 = vpop.f32.mrf.mxu0
      %v1395 = vadd.f32 0.0, %v1394
      %v1396 = vpop.f32.mrf.mxu0
      %1397 = vmatprep.mubr.f32.mxu0 0.0
      %1398 = vmatmul.mubr.f32.gmra.mxu0 %v1266
      %v1399 = vpop.f32.mrf.mxu0
      %v1400 = vadd.f32 0.0, %v1399
      %v1401 = vpop.f32.mrf.mxu0
      %1402 = vmatprep.mubr.f32.mxu0 0.0
      %1403 = vmatmul.mubr.f32.gmra.mxu0 %v1269
      %v1404 = vpop.f32.mrf.mxu0
      %v1405 = vadd.f32 0.0, %v1404
      %v1406 = vpop.f32.mrf.mxu0
      %1407 = vmatprep.mubr.f32.mxu0 0.0
      %1408 = vmatmul.mubr.f32.gmra.mxu0 %v1272
      %v1409 = vpop.f32.mrf.mxu0
      %v1410 = vadd.f32 0.0, %v1409
      %v1411 = vpop.f32.mrf.mxu0
      %1412 = vmatprep.mubr.f32.mxu0 0.0
      %1413 = vmatmul.mubr.f32.gmra.mxu0 %v1275
      %v1414 = vpop.f32.mrf.mxu0
      %v1415 = vadd.f32 0.0, %v1414
      %v1416 = vpop.f32.mrf.mxu0
      %1417 = vmatprep.mubr.f32.mxu0 0.0
      %1418 = vmatmul.mubr.f32.gmra.mxu0 %v1278
      %v1419 = vpop.f32.mrf.mxu0
      %v1420 = vadd.f32 0.0, %v1419
      %v1421 = vpop.f32.mrf.mxu0
      %1422 = vmatprep.mubr.f32.mxu0 0.0
      %1423 = vmatmul.mubr.f32.gmra.mxu0 %v1281
      %v1424 = vpop.f32.mrf.mxu0
      %v1425 = vadd.f32 0.0, %v1424
      %v1426 = vpop.f32.mrf.mxu0
      %1427 = vdwg.mxu0
      %v1428 = vadd.f32 %v1153, %v1350
      %v1429 = vadd.f32 %v1158, %v1355
      %v1430 = vadd.f32 %v1163, %v1360
      %v1431 = vadd.f32 %v1168, %v1365
      %v1432 = vadd.f32 %v1173, %v1370
      %v1433 = vadd.f32 %v1178, %v1375
      %v1434 = vadd.f32 %v1183, %v1380
      %v1435 = vadd.f32 %v1188, %v1385
      %v1436 = vadd.f32 %v1193, %v1390
      %v1437 = vadd.f32 %v1198, %v1395
      %v1438 = vadd.f32 %v1203, %v1400
      %v1439 = vadd.f32 %v1208, %v1405
      %v1440 = vadd.f32 %v1213, %v1410
      %v1441 = vadd.f32 %v1218, %v1415
      %v1442 = vadd.f32 %v1223, %v1420
      %v1443 = vadd.f32 %v1228, %v1425
      %v1444 = vld [vmem:[%s3 + $0x1] sm:$0x1]
      %v1445 = vlaneseq
      %v1446 = vshrl.u32 %v1445, 7
      %v1447 = vsub.s32 0, %v1446
      %v1448 = vrot.slane %v1444, %v1447
      %v1449 = vadd.f32 %v1428, %v1448
      %v1450 = vadd.f32 %v1429, %v1448
      %v1451 = vadd.f32 %v1430, %v1448
      %v1452 = vadd.f32 %v1431, %v1448
      %v1453 = vadd.f32 %v1432, %v1448
      %v1454 = vadd.f32 %v1433, %v1448
      %v1455 = vadd.f32 %v1434, %v1448
      %v1456 = vadd.f32 %v1435, %v1448
      %v1457 = vadd.f32 %v1436, %v1448
      %v1458 = vadd.f32 %v1437, %v1448
      %v1459 = vadd.f32 %v1438, %v1448
      %v1460 = vadd.f32 %v1439, %v1448
      %v1461 = vadd.f32 %v1440, %v1448
      %v1462 = vadd.f32 %v1441, %v1448
      %v1463 = vadd.f32 %v1442, %v1448
      %v1464 = vadd.f32 %v1443, %v1448
      %v1465 = vmax.f32 %v1449, 0.0
      %v1466 = vmax.f32 %v1450, 0.0
      %v1467 = vmax.f32 %v1451, 0.0
      %v1468 = vmax.f32 %v1452, 0.0
      %v1469 = vmax.f32 %v1453, 0.0
      %v1470 = vmax.f32 %v1454, 0.0
      %v1471 = vmax.f32 %v1455, 0.0
      %v1472 = vmax.f32 %v1456, 0.0
      %v1473 = vmax.f32 %v1457, 0.0
      %v1474 = vmax.f32 %v1458, 0.0
      %v1475 = vmax.f32 %v1459, 0.0
      %v1476 = vmax.f32 %v1460, 0.0
      %v1477 = vmax.f32 %v1461, 0.0
      %v1478 = vmax.f32 %v1462, 0.0
      %v1479 = vmax.f32 %v1463, 0.0
      %v1480 = vmax.f32 %v1464, 0.0
      %v1481 = vrot.slane %v1465, 7
      %v1482 = vrot.slane %v1466, 7
      %v1483 = vrot.slane %v1467, 7
      %v1484 = vrot.slane %v1468, 7
      %v1485 = vrot.slane %v1469, 7
      %v1486 = vrot.slane %v1470, 7
      %v1487 = vrot.slane %v1471, 7
      %v1488 = vrot.slane %v1472, 7
      %v1489 = vrot.slane %v1473, 7
      %v1490 = vrot.slane %v1474, 7
      %v1491 = vrot.slane %v1475, 7
      %v1492 = vrot.slane %v1476, 7
      %v1493 = vrot.slane %v1477, 7
      %v1494 = vrot.slane %v1478, 7
      %v1495 = vrot.slane %v1479, 7
      %v1496 = vrot.slane %v1480, 7
      %v1497 = vsel %vm692, %v1495, %v1496
      %v1498 = vsel %vm692, %v1494, %v1495
      %v1499 = vsel %vm692, %v1493, %v1494
      %v1500 = vsel %vm692, %v1492, %v1493
      %v1501 = vsel %vm692, %v1491, %v1492
      %v1502 = vsel %vm692, %v1490, %v1491
      %v1503 = vsel %vm692, %v1489, %v1490
      %v1504 = vsel %vm692, %v1488, %v1489
      %v1505 = vsel %vm692, %v1487, %v1488
      %v1506 = vsel %vm692, %v1486, %v1487
      %v1507 = vsel %vm692, %v1485, %v1486
      %v1508 = vsel %vm692, %v1484, %v1485
      %v1509 = vsel %vm692, %v1483, %v1484
      %v1510 = vsel %vm692, %v1482, %v1483
      %v1511 = vsel %vm692, %v1481, %v1482
      %v1512 = vsel %vm692, %v1496, %v1481
      %v1513 = vsel %vm725, %v1512, 0.0
      %v1514 = vsel %vm726, %v1511, 0.0
      %v1515 = vsel %vm727, %v1510, 0.0
      %v1516 = vsel %vm728, %v1509, 0.0
      %v1517 = vsel %vm729, %v1508, 0.0
      %v1518 = vsel %vm730, %v1507, 0.0
      %v1519 = vsel %vm731, %v1506, 0.0
      %v1520 = vsel %vm732, %v1505, 0.0
      %v1521 = vsel %vm733, %v1504, 0.0
      %v1522 = vsel %vm734, %v1503, 0.0
      %v1523 = vsel %vm735, %v1502, 0.0
      %v1524 = vsel %vm736, %v1501, 0.0
      %v1525 = vsel %vm737, %v1500, 0.0
      %v1526 = vsel %vm738, %v1499, 0.0
      %v1527 = vsel %vm739, %v1498, 0.0
      %v1528 = vsel %vm740, %v1497, 0.0
      %v1529 = vrot.slane %v1465, 1
      %v1530 = vrot.slane %v1466, 1
      %v1531 = vrot.slane %v1467, 1
      %v1532 = vrot.slane %v1468, 1
      %v1533 = vrot.slane %v1469, 1
      %v1534 = vrot.slane %v1470, 1
      %v1535 = vrot.slane %v1471, 1
      %v1536 = vrot.slane %v1472, 1
      %v1537 = vrot.slane %v1473, 1
      %v1538 = vrot.slane %v1474, 1
      %v1539 = vrot.slane %v1475, 1
      %v1540 = vrot.slane %v1476, 1
      %v1541 = vrot.slane %v1477, 1
      %v1542 = vrot.slane %v1478, 1
      %v1543 = vrot.slane %v1479, 1
      %v1544 = vrot.slane %v1480, 1
      %v1545 = vsel %vm773, %v1543, %v1544
      %v1546 = vsel %vm773, %v1542, %v1543
      %v1547 = vsel %vm773, %v1541, %v1542
      %v1548 = vsel %vm773, %v1540, %v1541
      %v1549 = vsel %vm773, %v1539, %v1540
      %v1550 = vsel %vm773, %v1538, %v1539
      %v1551 = vsel %vm773, %v1537, %v1538
      %v1552 = vsel %vm773, %v1536, %v1537
      %v1553 = vsel %vm773, %v1535, %v1536
      %v1554 = vsel %vm773, %v1534, %v1535
      %v1555 = vsel %vm773, %v1533, %v1534
      %v1556 = vsel %vm773, %v1532, %v1533
      %v1557 = vsel %vm773, %v1531, %v1532
      %v1558 = vsel %vm773, %v1530, %v1531
      %v1559 = vsel %vm773, %v1529, %v1530
      %v1560 = vsel %vm773, %v1544, %v1529
      %v1561 = vsel %vm806, %v1559, 0.0
      %v1562 = vsel %vm807, %v1558, 0.0
      %v1563 = vsel %vm808, %v1557, 0.0
      %v1564 = vsel %vm809, %v1556, 0.0
      %v1565 = vsel %vm810, %v1555, 0.0
      %v1566 = vsel %vm811, %v1554, 0.0
      %v1567 = vsel %vm812, %v1553, 0.0
      %v1568 = vsel %vm813, %v1552, 0.0
      %v1569 = vsel %vm814, %v1551, 0.0
      %v1570 = vsel %vm815, %v1550, 0.0
      %v1571 = vsel %vm816, %v1549, 0.0
      %v1572 = vsel %vm817, %v1548, 0.0
      %v1573 = vsel %vm818, %v1547, 0.0
      %v1574 = vsel %vm819, %v1546, 0.0
      %v1575 = vsel %vm820, %v1545, 0.0
      %v1576 = vsel %vm821, %v1560, 0.0
      %s1577 = scalar_lea.vmem %s2, 72
      %v1578 = vld [vmem:[%s1577] sm:$0xff]
      %v1579 = vld [vmem:[%s1577 + $0x8] sm:$0xff]
      %v1580 = vld [vmem:[%s1577 + $0x10] sm:$0xff]
      %s1581 = scalar_lea.vmem %s2, 96
      %v1582 = vld [vmem:[%s1581] sm:$0xff]
      %v1583 = vld [vmem:[%s1581 + $0x8] sm:$0xff]
      %v1584 = vld [vmem:[%s1581 + $0x10] sm:$0xff]
      %v1586 = vsel %vm466, %v1465, 0
      %v1589 = vsel %vm466, %v1466, 0
      %v1592 = vsel %vm466, %v1467, 0
      %v1595 = vsel %vm466, %v1468, 0
      %v1598 = vsel %vm466, %v1469, 0
      %v1601 = vsel %vm466, %v1470, 0
      %v1604 = vsel %vm466, %v1471, 0
      %v1607 = vsel %vm466, %v1472, 0
      %v1610 = vsel %vm466, %v1473, 0
      %v1613 = vsel %vm466, %v1474, 0
      %v1616 = vsel %vm466, %v1475, 0
      %v1619 = vsel %vm466, %v1476, 0
      %v1622 = vsel %vm466, %v1477, 0
      %v1625 = vsel %vm466, %v1478, 0
      %v1628 = vsel %vm466, %v1479, 0
      %v1631 = vsel %vm466, %v1480, 0
      %1633 = vmatprep.subr.mxu0 0.0
      %1634 = vmatpush1.msra.mxu0 0.0
      %1635 = vmatprep.subr.mxu0 0.0
      %1636 = vmatpush1.msra.mxu0 0.0
      %1637 = vmatprep.subr.mxu0 0.0
      %1638 = vmatpush1.msra.mxu0 0.0
      %1639 = vmatprep.subr.mxu0 0.0
      %1640 = vmatpush1.msra.mxu0 0.0
      %1641 = vmatprep.subr.mxu0 0.0
      %1642 = vmatpush1.msra.mxu0 0.0
      %1643 = vmatprep.subr.mxu0 0.0
      %1644 = vmatpush1.msra.mxu0 0.0
      %1645 = vmatprep.subr.mxu0 0.0
      %1646 = vmatpush1.msra.mxu0 0.0
      %1647 = vmatprep.subr.mxu0 0.0
      %1648 = vmatpush1.msra.mxu0 0.0
      %1649 = vmatprep.subr.mxu0 0.0
      %1650 = vmatpush1.msra.mxu0 0.0
      %1651 = vmatprep.subr.mxu0 0.0
      %1652 = vmatpush1.msra.mxu0 0.0
      %1653 = vmatprep.subr.mxu0 0.0
      %1654 = vmatpush1.msra.mxu0 0.0
      %1655 = vmatprep.subr.mxu0 0.0
      %1656 = vmatpush1.msra.mxu0 0.0
      %1657 = vmatprep.subr.mxu0 0.0
      %1658 = vmatpush1.msra.mxu0 0.0
      %1659 = vmatprep.subr.mxu0 0.0
      %1660 = vmatpush1.msra.mxu0 %v1584
      %1661 = vmatprep.subr.mxu0 0.0
      %1662 = vmatpush1.msra.mxu0 %v1583
      %1663 = vmatprep.subr.mxu0 0.0
      %1664 = vmatpush1.msra.mxu0 %v1582
      %1665 = vmatprep.subr.mxu0 0.0
      %1666 = vmatpush2.msra.mxu0 0.0
      %1667 = vmatprep.subr.mxu0 0.0
      %1668 = vmatpush2.msra.mxu0 0.0
      %1669 = vmatprep.subr.mxu0 0.0
      %1670 = vmatpush2.msra.mxu0 0.0
      %1671 = vmatprep.subr.mxu0 0.0
      %1672 = vmatpush2.msra.mxu0 0.0
      %1673 = vmatprep.subr.mxu0 0.0
      %1674 = vmatpush2.msra.mxu0 0.0
      %1675 = vmatprep.subr.mxu0 0.0
      %1676 = vmatpush2.msra.mxu0 0.0
      %1677 = vmatprep.subr.mxu0 0.0
      %1678 = vmatpush2.msra.mxu0 0.0
      %1679 = vmatprep.subr.mxu0 0.0
      %1680 = vmatpush2.msra.mxu0 0.0
      %1681 = vmatprep.subr.mxu0 0.0
      %1682 = vmatpush2.msra.mxu0 0.0
      %1683 = vmatprep.subr.mxu0 0.0
      %1684 = vmatpush2.msra.mxu0 0.0
      %1685 = vmatprep.subr.mxu0 0.0
      %1686 = vmatpush2.msra.mxu0 0.0
      %1687 = vmatprep.subr.mxu0 0.0
      %1688 = vmatpush2.msra.mxu0 0.0
      %1689 = vmatprep.subr.mxu0 0.0
      %1690 = vmatpush2.msra.mxu0 0.0
      %1691 = vmatprep.subr.mxu0 0.0
      %1692 = vmatpush2.msra.mxu0 0.0
      %1693 = vmatprep.subr.mxu0 0.0
      %1694 = vmatpush2.msra.mxu0 0.0
      %1695 = vmatprep.subr.mxu0 0.0
      %1696 = vmatpush2.msra.mxu0 0.0
      %1697 = vmatprep.mubr.f32.mxu0 0.0
      %1698 = vmatmul.mubr.f32.gmra.mxu0 %v1586
      %v1699 = vpop.f32.mrf.mxu0
      %v1700 = vadd.f32 0.0, %v1699
      %v1701 = vpop.f32.mrf.mxu0
      %1702 = vmatprep.mubr.f32.mxu0 0.0
      %1703 = vmatmul.mubr.f32.gmra.mxu0 %v1589
      %v1704 = vpop.f32.mrf.mxu0
      %v1705 = vadd.f32 0.0, %v1704
      %v1706 = vpop.f32.mrf.mxu0
      %1707 = vmatprep.mubr.f32.mxu0 0.0
      %1708 = vmatmul.mubr.f32.gmra.mxu0 %v1592
      %v1709 = vpop.f32.mrf.mxu0
      %v1710 = vadd.f32 0.0, %v1709
      %v1711 = vpop.f32.mrf.mxu0
      %1712 = vmatprep.mubr.f32.mxu0 0.0
      %1713 = vmatmul.mubr.f32.gmra.mxu0 %v1595
      %v1714 = vpop.f32.mrf.mxu0
      %v1715 = vadd.f32 0.0, %v1714
      %v1716 = vpop.f32.mrf.mxu0
      %1717 = vmatprep.mubr.f32.mxu0 0.0
      %1718 = vmatmul.mubr.f32.gmra.mxu0 %v1598
      %v1719 = vpop.f32.mrf.mxu0
      %v1720 = vadd.f32 0.0, %v1719
      %v1721 = vpop.f32.mrf.mxu0
      %1722 = vmatprep.mubr.f32.mxu0 0.0
      %1723 = vmatmul.mubr.f32.gmra.mxu0 %v1601
      %v1724 = vpop.f32.mrf.mxu0
      %v1725 = vadd.f32 0.0, %v1724
      %v1726 = vpop.f32.mrf.mxu0
      %1727 = vmatprep.mubr.f32.mxu0 0.0
      %1728 = vmatmul.mubr.f32.gmra.mxu0 %v1604
      %v1729 = vpop.f32.mrf.mxu0
      %v1730 = vadd.f32 0.0, %v1729
      %v1731 = vpop.f32.mrf.mxu0
      %1732 = vmatprep.mubr.f32.mxu0 0.0
      %1733 = vmatmul.mubr.f32.gmra.mxu0 %v1607
      %v1734 = vpop.f32.mrf.mxu0
      %v1735 = vadd.f32 0.0, %v1734
      %v1736 = vpop.f32.mrf.mxu0
      %1737 = vmatprep.mubr.f32.mxu0 0.0
      %1738 = vmatmul.mubr.f32.gmra.mxu0 %v1610
      %v1739 = vpop.f32.mrf.mxu0
      %v1740 = vadd.f32 0.0, %v1739
      %v1741 = vpop.f32.mrf.mxu0
      %1742 = vmatprep.mubr.f32.mxu0 0.0
      %1743 = vmatmul.mubr.f32.gmra.mxu0 %v1613
      %v1744 = vpop.f32.mrf.mxu0
      %v1745 = vadd.f32 0.0, %v1744
      %v1746 = vpop.f32.mrf.mxu0
      %1747 = vmatprep.mubr.f32.mxu0 0.0
      %1748 = vmatmul.mubr.f32.gmra.mxu0 %v1616
      %v1749 = vpop.f32.mrf.mxu0
      %v1750 = vadd.f32 0.0, %v1749
      %v1751 = vpop.f32.mrf.mxu0
      %1752 = vmatprep.mubr.f32.mxu0 0.0
      %1753 = vmatmul.mubr.f32.gmra.mxu0 %v1619
      %v1754 = vpop.f32.mrf.mxu0
      %v1755 = vadd.f32 0.0, %v1754
      %v1756 = vpop.f32.mrf.mxu0
      %1757 = vmatprep.mubr.f32.mxu0 0.0
      %1758 = vmatmul.mubr.f32.gmra.mxu0 %v1622
      %v1759 = vpop.f32.mrf.mxu0
      %v1760 = vadd.f32 0.0, %v1759
      %v1761 = vpop.f32.mrf.mxu0
      %1762 = vmatprep.mubr.f32.mxu0 0.0
      %1763 = vmatmul.mubr.f32.gmra.mxu0 %v1625
      %v1764 = vpop.f32.mrf.mxu0
      %v1765 = vadd.f32 0.0, %v1764
      %v1766 = vpop.f32.mrf.mxu0
      %1767 = vmatprep.mubr.f32.mxu0 0.0
      %1768 = vmatmul.mubr.f32.gmra.mxu0 %v1628
      %v1769 = vpop.f32.mrf.mxu0
      %v1770 = vadd.f32 0.0, %v1769
      %v1771 = vpop.f32.mrf.mxu0
      %1772 = vmatprep.mubr.f32.mxu0 0.0
      %1773 = vmatmul.mubr.f32.gmra.mxu0 %v1631
      %v1774 = vpop.f32.mrf.mxu0
      %v1775 = vadd.f32 0.0, %v1774
      %v1776 = vpop.f32.mrf.mxu0
      %1777 = vdwg.mxu0
      %v1779 = vsel %vm466, %v1513, 0
      %v1782 = vsel %vm466, %v1514, 0
      %v1785 = vsel %vm466, %v1515, 0
      %v1788 = vsel %vm466, %v1516, 0
      %v1791 = vsel %vm466, %v1517, 0
      %v1794 = vsel %vm466, %v1518, 0
      %v1797 = vsel %vm466, %v1519, 0
      %v1800 = vsel %vm466, %v1520, 0
      %v1803 = vsel %vm466, %v1521, 0
      %v1806 = vsel %vm466, %v1522, 0
      %v1809 = vsel %vm466, %v1523, 0
      %v1812 = vsel %vm466, %v1524, 0
      %v1815 = vsel %vm466, %v1525, 0
      %v1818 = vsel %vm466, %v1526, 0
      %v1821 = vsel %vm466, %v1527, 0
      %v1824 = vsel %vm466, %v1528, 0
      %1826 = vmatprep.subr.mxu0 0.0
      %1827 = vmatpush1.msra.mxu0 0.0
      %1828 = vmatprep.subr.mxu0 0.0
      %1829 = vmatpush1.msra.mxu0 0.0
      %1830 = vmatprep.subr.mxu0 0.0
      %1831 = vmatpush1.msra.mxu0 0.0
      %1832 = vmatprep.subr.mxu0 0.0
      %1833 = vmatpush1.msra.mxu0 0.0
      %1834 = vmatprep.subr.mxu0 0.0
      %1835 = vmatpush1.msra.mxu0 0.0
      %1836 = vmatprep.subr.mxu0 0.0
      %1837 = vmatpush1.msra.mxu0 0.0
      %1838 = vmatprep.subr.mxu0 0.0
      %1839 = vmatpush1.msra.mxu0 0.0
      %1840 = vmatprep.subr.mxu0 0.0
      %1841 = vmatpush1.msra.mxu0 0.0
      %1842 = vmatprep.subr.mxu0 0.0
      %1843 = vmatpush1.msra.mxu0 0.0
      %1844 = vmatprep.subr.mxu0 0.0
      %1845 = vmatpush1.msra.mxu0 0.0
      %1846 = vmatprep.subr.mxu0 0.0
      %1847 = vmatpush1.msra.mxu0 0.0
      %1848 = vmatprep.subr.mxu0 0.0
      %1849 = vmatpush1.msra.mxu0 0.0
      %1850 = vmatprep.subr.mxu0 0.0
      %1851 = vmatpush1.msra.mxu0 0.0
      %1852 = vmatprep.subr.mxu0 0.0
      %1853 = vmatpush1.msra.mxu0 %v1580
      %1854 = vmatprep.subr.mxu0 0.0
      %1855 = vmatpush1.msra.mxu0 %v1579
      %1856 = vmatprep.subr.mxu0 0.0
      %1857 = vmatpush1.msra.mxu0 %v1578
      %1858 = vmatprep.subr.mxu0 0.0
      %1859 = vmatpush2.msra.mxu0 0.0
      %1860 = vmatprep.subr.mxu0 0.0
      %1861 = vmatpush2.msra.mxu0 0.0
      %1862 = vmatprep.subr.mxu0 0.0
      %1863 = vmatpush2.msra.mxu0 0.0
      %1864 = vmatprep.subr.mxu0 0.0
      %1865 = vmatpush2.msra.mxu0 0.0
      %1866 = vmatprep.subr.mxu0 0.0
      %1867 = vmatpush2.msra.mxu0 0.0
      %1868 = vmatprep.subr.mxu0 0.0
      %1869 = vmatpush2.msra.mxu0 0.0
      %1870 = vmatprep.subr.mxu0 0.0
      %1871 = vmatpush2.msra.mxu0 0.0
      %1872 = vmatprep.subr.mxu0 0.0
      %1873 = vmatpush2.msra.mxu0 0.0
      %1874 = vmatprep.subr.mxu0 0.0
      %1875 = vmatpush2.msra.mxu0 0.0
      %1876 = vmatprep.subr.mxu0 0.0
      %1877 = vmatpush2.msra.mxu0 0.0
      %1878 = vmatprep.subr.mxu0 0.0
      %1879 = vmatpush2.msra.mxu0 0.0
      %1880 = vmatprep.subr.mxu0 0.0
      %1881 = vmatpush2.msra.mxu0 0.0
      %1882 = vmatprep.subr.mxu0 0.0
      %1883 = vmatpush2.msra.mxu0 0.0
      %1884 = vmatprep.subr.mxu0 0.0
      %1885 = vmatpush2.msra.mxu0 0.0
      %1886 = vmatprep.subr.mxu0 0.0
      %1887 = vmatpush2.msra.mxu0 0.0
      %1888 = vmatprep.subr.mxu0 0.0
      %1889 = vmatpush2.msra.mxu0 0.0
      %1890 = vmatprep.mubr.f32.mxu0 0.0
      %1891 = vmatmul.mubr.f32.gmra.mxu0 %v1779
      %v1892 = vpop.f32.mrf.mxu0
      %v1893 = vadd.f32 %v1700, %v1892
      %v1894 = vpop.f32.mrf.mxu0
      %1895 = vmatprep.mubr.f32.mxu0 0.0
      %1896 = vmatmul.mubr.f32.gmra.mxu0 %v1782
      %v1897 = vpop.f32.mrf.mxu0
      %v1898 = vadd.f32 %v1705, %v1897
      %v1899 = vpop.f32.mrf.mxu0
      %1900 = vmatprep.mubr.f32.mxu0 0.0
      %1901 = vmatmul.mubr.f32.gmra.mxu0 %v1785
      %v1902 = vpop.f32.mrf.mxu0
      %v1903 = vadd.f32 %v1710, %v1902
      %v1904 = vpop.f32.mrf.mxu0
      %1905 = vmatprep.mubr.f32.mxu0 0.0
      %1906 = vmatmul.mubr.f32.gmra.mxu0 %v1788
      %v1907 = vpop.f32.mrf.mxu0
      %v1908 = vadd.f32 %v1715, %v1907
      %v1909 = vpop.f32.mrf.mxu0
      %1910 = vmatprep.mubr.f32.mxu0 0.0
      %1911 = vmatmul.mubr.f32.gmra.mxu0 %v1791
      %v1912 = vpop.f32.mrf.mxu0
      %v1913 = vadd.f32 %v1720, %v1912
      %v1914 = vpop.f32.mrf.mxu0
      %1915 = vmatprep.mubr.f32.mxu0 0.0
      %1916 = vmatmul.mubr.f32.gmra.mxu0 %v1794
      %v1917 = vpop.f32.mrf.mxu0
      %v1918 = vadd.f32 %v1725, %v1917
      %v1919 = vpop.f32.mrf.mxu0
      %1920 = vmatprep.mubr.f32.mxu0 0.0
      %1921 = vmatmul.mubr.f32.gmra.mxu0 %v1797
      %v1922 = vpop.f32.mrf.mxu0
      %v1923 = vadd.f32 %v1730, %v1922
      %v1924 = vpop.f32.mrf.mxu0
      %1925 = vmatprep.mubr.f32.mxu0 0.0
      %1926 = vmatmul.mubr.f32.gmra.mxu0 %v1800
      %v1927 = vpop.f32.mrf.mxu0
      %v1928 = vadd.f32 %v1735, %v1927
      %v1929 = vpop.f32.mrf.mxu0
      %1930 = vmatprep.mubr.f32.mxu0 0.0
      %1931 = vmatmul.mubr.f32.gmra.mxu0 %v1803
      %v1932 = vpop.f32.mrf.mxu0
      %v1933 = vadd.f32 %v1740, %v1932
      %v1934 = vpop.f32.mrf.mxu0
      %1935 = vmatprep.mubr.f32.mxu0 0.0
      %1936 = vmatmul.mubr.f32.gmra.mxu0 %v1806
      %v1937 = vpop.f32.mrf.mxu0
      %v1938 = vadd.f32 %v1745, %v1937
      %v1939 = vpop.f32.mrf.mxu0
      %1940 = vmatprep.mubr.f32.mxu0 0.0
      %1941 = vmatmul.mubr.f32.gmra.mxu0 %v1809
      %v1942 = vpop.f32.mrf.mxu0
      %v1943 = vadd.f32 %v1750, %v1942
      %v1944 = vpop.f32.mrf.mxu0
      %1945 = vmatprep.mubr.f32.mxu0 0.0
      %1946 = vmatmul.mubr.f32.gmra.mxu0 %v1812
      %v1947 = vpop.f32.mrf.mxu0
      %v1948 = vadd.f32 %v1755, %v1947
      %v1949 = vpop.f32.mrf.mxu0
      %1950 = vmatprep.mubr.f32.mxu0 0.0
      %1951 = vmatmul.mubr.f32.gmra.mxu0 %v1815
      %v1952 = vpop.f32.mrf.mxu0
      %v1953 = vadd.f32 %v1760, %v1952
      %v1954 = vpop.f32.mrf.mxu0
      %1955 = vmatprep.mubr.f32.mxu0 0.0
      %1956 = vmatmul.mubr.f32.gmra.mxu0 %v1818
      %v1957 = vpop.f32.mrf.mxu0
      %v1958 = vadd.f32 %v1765, %v1957
      %v1959 = vpop.f32.mrf.mxu0
      %1960 = vmatprep.mubr.f32.mxu0 0.0
      %1961 = vmatmul.mubr.f32.gmra.mxu0 %v1821
      %v1962 = vpop.f32.mrf.mxu0
      %v1963 = vadd.f32 %v1770, %v1962
      %v1964 = vpop.f32.mrf.mxu0
      %1965 = vmatprep.mubr.f32.mxu0 0.0
      %1966 = vmatmul.mubr.f32.gmra.mxu0 %v1824
      %v1967 = vpop.f32.mrf.mxu0
      %v1968 = vadd.f32 %v1775, %v1967
      %v1969 = vpop.f32.mrf.mxu0
      %1970 = vdwg.mxu0
      %s1971 = scalar_lea.vmem %s2, 120
      %v1972 = vld [vmem:[%s1971] sm:$0xff]
      %v1973 = vld [vmem:[%s1971 + $0x8] sm:$0xff]
      %v1974 = vld [vmem:[%s1971 + $0x10] sm:$0xff]
      %v1976 = vsel %vm466, %v1561, 0
      %v1979 = vsel %vm466, %v1562, 0
      %v1982 = vsel %vm466, %v1563, 0
      %v1985 = vsel %vm466, %v1564, 0
      %v1988 = vsel %vm466, %v1565, 0
      %v1991 = vsel %vm466, %v1566, 0
      %v1994 = vsel %vm466, %v1567, 0
      %v1997 = vsel %vm466, %v1568, 0
      %v2000 = vsel %vm466, %v1569, 0
      %v2003 = vsel %vm466, %v1570, 0
      %v2006 = vsel %vm466, %v1571, 0
      %v2009 = vsel %vm466, %v1572, 0
      %v2012 = vsel %vm466, %v1573, 0
      %v2015 = vsel %vm466, %v1574, 0
      %v2018 = vsel %vm466, %v1575, 0
      %v2021 = vsel %vm466, %v1576, 0
      %2023 = vmatprep.subr.mxu0 0.0
      %2024 = vmatpush1.msra.mxu0 0.0
      %2025 = vmatprep.subr.mxu0 0.0
      %2026 = vmatpush1.msra.mxu0 0.0
      %2027 = vmatprep.subr.mxu0 0.0
      %2028 = vmatpush1.msra.mxu0 0.0
      %2029 = vmatprep.subr.mxu0 0.0
      %2030 = vmatpush1.msra.mxu0 0.0
      %2031 = vmatprep.subr.mxu0 0.0
      %2032 = vmatpush1.msra.mxu0 0.0
      %2033 = vmatprep.subr.mxu0 0.0
      %2034 = vmatpush1.msra.mxu0 0.0
      %2035 = vmatprep.subr.mxu0 0.0
      %2036 = vmatpush1.msra.mxu0 0.0
      %2037 = vmatprep.subr.mxu0 0.0
      %2038 = vmatpush1.msra.mxu0 0.0
      %2039 = vmatprep.subr.mxu0 0.0
      %2040 = vmatpush1.msra.mxu0 0.0
      %2041 = vmatprep.subr.mxu0 0.0
      %2042 = vmatpush1.msra.mxu0 0.0
      %2043 = vmatprep.subr.mxu0 0.0
      %2044 = vmatpush1.msra.mxu0 0.0
      %2045 = vmatprep.subr.mxu0 0.0
      %2046 = vmatpush1.msra.mxu0 0.0
      %2047 = vmatprep.subr.mxu0 0.0
      %2048 = vmatpush1.msra.mxu0 0.0
      %2049 = vmatprep.subr.mxu0 0.0
      %2050 = vmatpush1.msra.mxu0 %v1974
      %2051 = vmatprep.subr.mxu0 0.0
      %2052 = vmatpush1.msra.mxu0 %v1973
      %2053 = vmatprep.subr.mxu0 0.0
      %2054 = vmatpush1.msra.mxu0 %v1972
      %2055 = vmatprep.subr.mxu0 0.0
      %2056 = vmatpush2.msra.mxu0 0.0
      %2057 = vmatprep.subr.mxu0 0.0
      %2058 = vmatpush2.msra.mxu0 0.0
      %2059 = vmatprep.subr.mxu0 0.0
      %2060 = vmatpush2.msra.mxu0 0.0
      %2061 = vmatprep.subr.mxu0 0.0
      %2062 = vmatpush2.msra.mxu0 0.0
      %2063 = vmatprep.subr.mxu0 0.0
      %2064 = vmatpush2.msra.mxu0 0.0
      %2065 = vmatprep.subr.mxu0 0.0
      %2066 = vmatpush2.msra.mxu0 0.0
      %2067 = vmatprep.subr.mxu0 0.0
      %2068 = vmatpush2.msra.mxu0 0.0
      %2069 = vmatprep.subr.mxu0 0.0
      %2070 = vmatpush2.msra.mxu0 0.0
      %2071 = vmatprep.subr.mxu0 0.0
      %2072 = vmatpush2.msra.mxu0 0.0
      %2073 = vmatprep.subr.mxu0 0.0
      %2074 = vmatpush2.msra.mxu0 0.0
      %2075 = vmatprep.subr.mxu0 0.0
      %2076 = vmatpush2.msra.mxu0 0.0
      %2077 = vmatprep.subr.mxu0 0.0
      %2078 = vmatpush2.msra.mxu0 0.0
      %2079 = vmatprep.subr.mxu0 0.0
      %2080 = vmatpush2.msra.mxu0 0.0
      %2081 = vmatprep.subr.mxu0 0.0
      %2082 = vmatpush2.msra.mxu0 0.0
      %2083 = vmatprep.subr.mxu0 0.0
      %2084 = vmatpush2.msra.mxu0 0.0
      %2085 = vmatprep.subr.mxu0 0.0
      %2086 = vmatpush2.msra.mxu0 0.0
      %2087 = vmatprep.mubr.f32.mxu0 0.0
      %2088 = vmatmul.mubr.f32.gmra.mxu0 %v1976
      %v2089 = vpop.f32.mrf.mxu0
      %v2090 = vadd.f32 0.0, %v2089
      %v2091 = vpop.f32.mrf.mxu0
      %2092 = vmatprep.mubr.f32.mxu0 0.0
      %2093 = vmatmul.mubr.f32.gmra.mxu0 %v1979
      %v2094 = vpop.f32.mrf.mxu0
      %v2095 = vadd.f32 0.0, %v2094
      %v2096 = vpop.f32.mrf.mxu0
      %2097 = vmatprep.mubr.f32.mxu0 0.0
      %2098 = vmatmul.mubr.f32.gmra.mxu0 %v1982
      %v2099 = vpop.f32.mrf.mxu0
      %v2100 = vadd.f32 0.0, %v2099
      %v2101 = vpop.f32.mrf.mxu0
      %2102 = vmatprep.mubr.f32.mxu0 0.0
      %2103 = vmatmul.mubr.f32.gmra.mxu0 %v1985
      %v2104 = vpop.f32.mrf.mxu0
      %v2105 = vadd.f32 0.0, %v2104
      %v2106 = vpop.f32.mrf.mxu0
      %2107 = vmatprep.mubr.f32.mxu0 0.0
      %2108 = vmatmul.mubr.f32.gmra.mxu0 %v1988
      %v2109 = vpop.f32.mrf.mxu0
      %v2110 = vadd.f32 0.0, %v2109
      %v2111 = vpop.f32.mrf.mxu0
      %2112 = vmatprep.mubr.f32.mxu0 0.0
      %2113 = vmatmul.mubr.f32.gmra.mxu0 %v1991
      %v2114 = vpop.f32.mrf.mxu0
      %v2115 = vadd.f32 0.0, %v2114
      %v2116 = vpop.f32.mrf.mxu0
      %2117 = vmatprep.mubr.f32.mxu0 0.0
      %2118 = vmatmul.mubr.f32.gmra.mxu0 %v1994
      %v2119 = vpop.f32.mrf.mxu0
      %v2120 = vadd.f32 0.0, %v2119
      %v2121 = vpop.f32.mrf.mxu0
      %2122 = vmatprep.mubr.f32.mxu0 0.0
      %2123 = vmatmul.mubr.f32.gmra.mxu0 %v1997
      %v2124 = vpop.f32.mrf.mxu0
      %v2125 = vadd.f32 0.0, %v2124
      %v2126 = vpop.f32.mrf.mxu0
      %2127 = vmatprep.mubr.f32.mxu0 0.0
      %2128 = vmatmul.mubr.f32.gmra.mxu0 %v2000
      %v2129 = vpop.f32.mrf.mxu0
      %v2130 = vadd.f32 0.0, %v2129
      %v2131 = vpop.f32.mrf.mxu0
      %2132 = vmatprep.mubr.f32.mxu0 0.0
      %2133 = vmatmul.mubr.f32.gmra.mxu0 %v2003
      %v2134 = vpop.f32.mrf.mxu0
      %v2135 = vadd.f32 0.0, %v2134
      %v2136 = vpop.f32.mrf.mxu0
      %2137 = vmatprep.mubr.f32.mxu0 0.0
      %2138 = vmatmul.mubr.f32.gmra.mxu0 %v2006
      %v2139 = vpop.f32.mrf.mxu0
      %v2140 = vadd.f32 0.0, %v2139
      %v2141 = vpop.f32.mrf.mxu0
      %2142 = vmatprep.mubr.f32.mxu0 0.0
      %2143 = vmatmul.mubr.f32.gmra.mxu0 %v2009
      %v2144 = vpop.f32.mrf.mxu0
      %v2145 = vadd.f32 0.0, %v2144
      %v2146 = vpop.f32.mrf.mxu0
      %2147 = vmatprep.mubr.f32.mxu0 0.0
      %2148 = vmatmul.mubr.f32.gmra.mxu0 %v2012
      %v2149 = vpop.f32.mrf.mxu0
      %v2150 = vadd.f32 0.0, %v2149
      %v2151 = vpop.f32.mrf.mxu0
      %2152 = vmatprep.mubr.f32.mxu0 0.0
      %2153 = vmatmul.mubr.f32.gmra.mxu0 %v2015
      %v2154 = vpop.f32.mrf.mxu0
      %v2155 = vadd.f32 0.0, %v2154
      %v2156 = vpop.f32.mrf.mxu0
      %2157 = vmatprep.mubr.f32.mxu0 0.0
      %2158 = vmatmul.mubr.f32.gmra.mxu0 %v2018
      %v2159 = vpop.f32.mrf.mxu0
      %v2160 = vadd.f32 0.0, %v2159
      %v2161 = vpop.f32.mrf.mxu0
      %2162 = vmatprep.mubr.f32.mxu0 0.0
      %2163 = vmatmul.mubr.f32.gmra.mxu0 %v2021
      %v2164 = vpop.f32.mrf.mxu0
      %v2165 = vadd.f32 0.0, %v2164
      %v2166 = vpop.f32.mrf.mxu0
      %2167 = vdwg.mxu0
      %v2168 = vadd.f32 %v1893, %v2090
      %v2169 = vadd.f32 %v1898, %v2095
      %v2170 = vadd.f32 %v1903, %v2100
      %v2171 = vadd.f32 %v1908, %v2105
      %v2172 = vadd.f32 %v1913, %v2110
      %v2173 = vadd.f32 %v1918, %v2115
      %v2174 = vadd.f32 %v1923, %v2120
      %v2175 = vadd.f32 %v1928, %v2125
      %v2176 = vadd.f32 %v1933, %v2130
      %v2177 = vadd.f32 %v1938, %v2135
      %v2178 = vadd.f32 %v1943, %v2140
      %v2179 = vadd.f32 %v1948, %v2145
      %v2180 = vadd.f32 %v1953, %v2150
      %v2181 = vadd.f32 %v1958, %v2155
      %v2182 = vadd.f32 %v1963, %v2160
      %v2183 = vadd.f32 %v1968, %v2165
      %v2184 = vld [vmem:[%s3 + $0x2] sm:$0x1]
      %v2185 = vlaneseq
      %v2186 = vshrl.u32 %v2185, 7
      %v2187 = vsub.s32 0, %v2186
      %v2188 = vrot.slane %v2184, %v2187
      %v2189 = vadd.f32 %v2168, %v2188
      %v2190 = vadd.f32 %v2169, %v2188
      %v2191 = vadd.f32 %v2170, %v2188
      %v2192 = vadd.f32 %v2171, %v2188
      %v2193 = vadd.f32 %v2172, %v2188
      %v2194 = vadd.f32 %v2173, %v2188
      %v2195 = vadd.f32 %v2174, %v2188
      %v2196 = vadd.f32 %v2175, %v2188
      %v2197 = vadd.f32 %v2176, %v2188
      %v2198 = vadd.f32 %v2177, %v2188
      %v2199 = vadd.f32 %v2178, %v2188
      %v2200 = vadd.f32 %v2179, %v2188
      %v2201 = vadd.f32 %v2180, %v2188
      %v2202 = vadd.f32 %v2181, %v2188
      %v2203 = vadd.f32 %v2182, %v2188
      %v2204 = vadd.f32 %v2183, %v2188
      %v2205 = vmax.f32 %v2189, 0.0
      %v2206 = vmax.f32 %v2190, 0.0
      %v2207 = vmax.f32 %v2191, 0.0
      %v2208 = vmax.f32 %v2192, 0.0
      %v2209 = vmax.f32 %v2193, 0.0
      %v2210 = vmax.f32 %v2194, 0.0
      %v2211 = vmax.f32 %v2195, 0.0
      %v2212 = vmax.f32 %v2196, 0.0
      %v2213 = vmax.f32 %v2197, 0.0
      %v2214 = vmax.f32 %v2198, 0.0
      %v2215 = vmax.f32 %v2199, 0.0
      %v2216 = vmax.f32 %v2200, 0.0
      %v2217 = vmax.f32 %v2201, 0.0
      %v2218 = vmax.f32 %v2202, 0.0
      %v2219 = vmax.f32 %v2203, 0.0
      %v2220 = vmax.f32 %v2204, 0.0
      %v2221 = vrot.slane %v2205, 7
      %v2222 = vrot.slane %v2206, 7
      %v2223 = vrot.slane %v2207, 7
      %v2224 = vrot.slane %v2208, 7
      %v2225 = vrot.slane %v2209, 7
      %v2226 = vrot.slane %v2210, 7
      %v2227 = vrot.slane %v2211, 7
      %v2228 = vrot.slane %v2212, 7
      %v2229 = vrot.slane %v2213, 7
      %v2230 = vrot.slane %v2214, 7
      %v2231 = vrot.slane %v2215, 7
      %v2232 = vrot.slane %v2216, 7
      %v2233 = vrot.slane %v2217, 7
      %v2234 = vrot.slane %v2218, 7
      %v2235 = vrot.slane %v2219, 7
      %v2236 = vrot.slane %v2220, 7
      %v2237 = vsel %vm692, %v2235, %v2236
      %v2238 = vsel %vm692, %v2234, %v2235
      %v2239 = vsel %vm692, %v2233, %v2234
      %v2240 = vsel %vm692, %v2232, %v2233
      %v2241 = vsel %vm692, %v2231, %v2232
      %v2242 = vsel %vm692, %v2230, %v2231
      %v2243 = vsel %vm692, %v2229, %v2230
      %v2244 = vsel %vm692, %v2228, %v2229
      %v2245 = vsel %vm692, %v2227, %v2228
      %v2246 = vsel %vm692, %v2226, %v2227
      %v2247 = vsel %vm692, %v2225, %v2226
      %v2248 = vsel %vm692, %v2224, %v2225
      %v2249 = vsel %vm692, %v2223, %v2224
      %v2250 = vsel %vm692, %v2222, %v2223
      %v2251 = vsel %vm692, %v2221, %v2222
      %v2252 = vsel %vm692, %v2236, %v2221
      %v2253 = vsel %vm725, %v2252, 0.0
      %v2254 = vsel %vm726, %v2251, 0.0
      %v2255 = vsel %vm727, %v2250, 0.0
      %v2256 = vsel %vm728, %v2249, 0.0
      %v2257 = vsel %vm729, %v2248, 0.0
      %v2258 = vsel %vm730, %v2247, 0.0
      %v2259 = vsel %vm731, %v2246, 0.0
      %v2260 = vsel %vm732, %v2245, 0.0
      %v2261 = vsel %vm733, %v2244, 0.0
      %v2262 = vsel %vm734, %v2243, 0.0
      %v2263 = vsel %vm735, %v2242, 0.0
      %v2264 = vsel %vm736, %v2241, 0.0
      %v2265 = vsel %vm737, %v2240, 0.0
      %v2266 = vsel %vm738, %v2239, 0.0
      %v2267 = vsel %vm739, %v2238, 0.0
      %v2268 = vsel %vm740, %v2237, 0.0
      %v2269 = vrot.slane %v2205, 1
      %v2270 = vrot.slane %v2206, 1
      %v2271 = vrot.slane %v2207, 1
      %v2272 = vrot.slane %v2208, 1
      %v2273 = vrot.slane %v2209, 1
      %v2274 = vrot.slane %v2210, 1
      %v2275 = vrot.slane %v2211, 1
      %v2276 = vrot.slane %v2212, 1
      %v2277 = vrot.slane %v2213, 1
      %v2278 = vrot.slane %v2214, 1
      %v2279 = vrot.slane %v2215, 1
      %v2280 = vrot.slane %v2216, 1
      %v2281 = vrot.slane %v2217, 1
      %v2282 = vrot.slane %v2218, 1
      %v2283 = vrot.slane %v2219, 1
      %v2284 = vrot.slane %v2220, 1
      %v2285 = vsel %vm773, %v2283, %v2284
      %v2286 = vsel %vm773, %v2282, %v2283
      %v2287 = vsel %vm773, %v2281, %v2282
      %v2288 = vsel %vm773, %v2280, %v2281
      %v2289 = vsel %vm773, %v2279, %v2280
      %v2290 = vsel %vm773, %v2278, %v2279
      %v2291 = vsel %vm773, %v2277, %v2278
      %v2292 = vsel %vm773, %v2276, %v2277
      %v2293 = vsel %vm773, %v2275, %v2276
      %v2294 = vsel %vm773, %v2274, %v2275
      %v2295 = vsel %vm773, %v2273, %v2274
      %v2296 = vsel %vm773, %v2272, %v2273
      %v2297 = vsel %vm773, %v2271, %v2272
      %v2298 = vsel %vm773, %v2270, %v2271
      %v2299 = vsel %vm773, %v2269, %v2270
      %v2300 = vsel %vm773, %v2284, %v2269
      %v2301 = vsel %vm806, %v2299, 0.0
      %v2302 = vsel %vm807, %v2298, 0.0
      %v2303 = vsel %vm808, %v2297, 0.0
      %v2304 = vsel %vm809, %v2296, 0.0
      %v2305 = vsel %vm810, %v2295, 0.0
      %v2306 = vsel %vm811, %v2294, 0.0
      %v2307 = vsel %vm812, %v2293, 0.0
      %v2308 = vsel %vm813, %v2292, 0.0
      %v2309 = vsel %vm814, %v2291, 0.0
      %v2310 = vsel %vm815, %v2290, 0.0
      %v2311 = vsel %vm816, %v2289, 0.0
      %v2312 = vsel %vm817, %v2288, 0.0
      %v2313 = vsel %vm818, %v2287, 0.0
      %v2314 = vsel %vm819, %v2286, 0.0
      %v2315 = vsel %vm820, %v2285, 0.0
      %v2316 = vsel %vm821, %v2300, 0.0
      %s2317 = scalar_lea.vmem %s2, 144
      %v2318 = vld [vmem:[%s2317] sm:$0xff]
      %v2319 = vld [vmem:[%s2317 + $0x8] sm:$0xff]
      %v2320 = vld [vmem:[%s2317 + $0x10] sm:$0xff]
      %s2321 = scalar_lea.vmem %s2, 168
      %v2322 = vld [vmem:[%s2321] sm:$0xff]
      %v2323 = vld [vmem:[%s2321 + $0x8] sm:$0xff]
      %v2324 = vld [vmem:[%s2321 + $0x10] sm:$0xff]
      %v2326 = vsel %vm466, %v2205, 0
      %v2329 = vsel %vm466, %v2206, 0
      %v2332 = vsel %vm466, %v2207, 0
      %v2335 = vsel %vm466, %v2208, 0
      %v2338 = vsel %vm466, %v2209, 0
      %v2341 = vsel %vm466, %v2210, 0
      %v2344 = vsel %vm466, %v2211, 0
      %v2347 = vsel %vm466, %v2212, 0
      %v2350 = vsel %vm466, %v2213, 0
      %v2353 = vsel %vm466, %v2214, 0
      %v2356 = vsel %vm466, %v2215, 0
      %v2359 = vsel %vm466, %v2216, 0
      %v2362 = vsel %vm466, %v2217, 0
      %v2365 = vsel %vm466, %v2218, 0
      %v2368 = vsel %vm466, %v2219, 0
      %v2371 = vsel %vm466, %v2220, 0
      %2373 = vmatprep.subr.mxu0 0.0
      %2374 = vmatpush1.msra.mxu0 0.0
      %2375 = vmatprep.subr.mxu0 0.0
      %2376 = vmatpush1.msra.mxu0 0.0
      %2377 = vmatprep.subr.mxu0 0.0
      %2378 = vmatpush1.msra.mxu0 0.0
      %2379 = vmatprep.subr.mxu0 0.0
      %2380 = vmatpush1.msra.mxu0 0.0
      %2381 = vmatprep.subr.mxu0 0.0
      %2382 = vmatpush1.msra.mxu0 0.0
      %2383 = vmatprep.subr.mxu0 0.0
      %2384 = vmatpush1.msra.mxu0 0.0
      %2385 = vmatprep.subr.mxu0 0.0
      %2386 = vmatpush1.msra.mxu0 0.0
      %2387 = vmatprep.subr.mxu0 0.0
      %2388 = vmatpush1.msra.mxu0 0.0
      %2389 = vmatprep.subr.mxu0 0.0
      %2390 = vmatpush1.msra.mxu0 0.0
      %2391 = vmatprep.subr.mxu0 0.0
      %2392 = vmatpush1.msra.mxu0 0.0
      %2393 = vmatprep.subr.mxu0 0.0
      %2394 = vmatpush1.msra.mxu0 0.0
      %2395 = vmatprep.subr.mxu0 0.0
      %2396 = vmatpush1.msra.mxu0 0.0
      %2397 = vmatprep.subr.mxu0 0.0
      %2398 = vmatpush1.msra.mxu0 0.0
      %2399 = vmatprep.subr.mxu0 0.0
      %2400 = vmatpush1.msra.mxu0 %v2324
      %2401 = vmatprep.subr.mxu0 0.0
      %2402 = vmatpush1.msra.mxu0 %v2323
      %2403 = vmatprep.subr.mxu0 0.0
      %2404 = vmatpush1.msra.mxu0 %v2322
      %2405 = vmatprep.subr.mxu0 0.0
      %2406 = vmatpush2.msra.mxu0 0.0
      %2407 = vmatprep.subr.mxu0 0.0
      %2408 = vmatpush2.msra.mxu0 0.0
      %2409 = vmatprep.subr.mxu0 0.0
      %2410 = vmatpush2.msra.mxu0 0.0
      %2411 = vmatprep.subr.mxu0 0.0
      %2412 = vmatpush2.msra.mxu0 0.0
      %2413 = vmatprep.subr.mxu0 0.0
      %2414 = vmatpush2.msra.mxu0 0.0
      %2415 = vmatprep.subr.mxu0 0.0
      %2416 = vmatpush2.msra.mxu0 0.0
      %2417 = vmatprep.subr.mxu0 0.0
      %2418 = vmatpush2.msra.mxu0 0.0
      %2419 = vmatprep.subr.mxu0 0.0
      %2420 = vmatpush2.msra.mxu0 0.0
      %2421 = vmatprep.subr.mxu0 0.0
      %2422 = vmatpush2.msra.mxu0 0.0
      %2423 = vmatprep.subr.mxu0 0.0
      %2424 = vmatpush2.msra.mxu0 0.0
      %2425 = vmatprep.subr.mxu0 0.0
      %2426 = vmatpush2.msra.mxu0 0.0
      %2427 = vmatprep.subr.mxu0 0.0
      %2428 = vmatpush2.msra.mxu0 0.0
      %2429 = vmatprep.subr.mxu0 0.0
      %2430 = vmatpush2.msra.mxu0 0.0
      %2431 = vmatprep.subr.mxu0 0.0
      %2432 = vmatpush2.msra.mxu0 0.0
      %2433 = vmatprep.subr.mxu0 0.0
      %2434 = vmatpush2.msra.mxu0 0.0
      %2435 = vmatprep.subr.mxu0 0.0
      %2436 = vmatpush2.msra.mxu0 0.0
      %2437 = vmatprep.mubr.f32.mxu0 0.0
      %2438 = vmatmul.mubr.f32.gmra.mxu0 %v2326
      %v2439 = vpop.f32.mrf.mxu0
      %v2440 = vadd.f32 0.0, %v2439
      %v2441 = vpop.f32.mrf.mxu0
      %2442 = vmatprep.mubr.f32.mxu0 0.0
      %2443 = vmatmul.mubr.f32.gmra.mxu0 %v2329
      %v2444 = vpop.f32.mrf.mxu0
      %v2445 = vadd.f32 0.0, %v2444
      %v2446 = vpop.f32.mrf.mxu0
      %2447 = vmatprep.mubr.f32.mxu0 0.0
      %2448 = vmatmul.mubr.f32.gmra.mxu0 %v2332
      %v2449 = vpop.f32.mrf.mxu0
      %v2450 = vadd.f32 0.0, %v2449
      %v2451 = vpop.f32.mrf.mxu0
      %2452 = vmatprep.mubr.f32.mxu0 0.0
      %2453 = vmatmul.mubr.f32.gmra.mxu0 %v2335
      %v2454 = vpop.f32.mrf.mxu0
      %v2455 = vadd.f32 0.0, %v2454
      %v2456 = vpop.f32.mrf.mxu0
      %2457 = vmatprep.mubr.f32.mxu0 0.0
      %2458 = vmatmul.mubr.f32.gmra.mxu0 %v2338
      %v2459 = vpop.f32.mrf.mxu0
      %v2460 = vadd.f32 0.0, %v2459
      %v2461 = vpop.f32.mrf.mxu0
      %2462 = vmatprep.mubr.f32.mxu0 0.0
      %2463 = vmatmul.mubr.f32.gmra.mxu0 %v2341
      %v2464 = vpop.f32.mrf.mxu0
      %v2465 = vadd.f32 0.0, %v2464
      %v2466 = vpop.f32.mrf.mxu0
      %2467 = vmatprep.mubr.f32.mxu0 0.0
      %2468 = vmatmul.mubr.f32.gmra.mxu0 %v2344
      %v2469 = vpop.f32.mrf.mxu0
      %v2470 = vadd.f32 0.0, %v2469
      %v2471 = vpop.f32.mrf.mxu0
      %2472 = vmatprep.mubr.f32.mxu0 0.0
      %2473 = vmatmul.mubr.f32.gmra.mxu0 %v2347
      %v2474 = vpop.f32.mrf.mxu0
      %v2475 = vadd.f32 0.0, %v2474
      %v2476 = vpop.f32.mrf.mxu0
      %2477 = vmatprep.mubr.f32.mxu0 0.0
      %2478 = vmatmul.mubr.f32.gmra.mxu0 %v2350
      %v2479 = vpop.f32.mrf.mxu0
      %v2480 = vadd.f32 0.0, %v2479
      %v2481 = vpop.f32.mrf.mxu0
      %2482 = vmatprep.mubr.f32.mxu0 0.0
      %2483 = vmatmul.mubr.f32.gmra.mxu0 %v2353
      %v2484 = vpop.f32.mrf.mxu0
      %v2485 = vadd.f32 0.0, %v2484
      %v2486 = vpop.f32.mrf.mxu0
      %2487 = vmatprep.mubr.f32.mxu0 0.0
      %2488 = vmatmul.mubr.f32.gmra.mxu0 %v2356
      %v2489 = vpop.f32.mrf.mxu0
      %v2490 = vadd.f32 0.0, %v2489
      %v2491 = vpop.f32.mrf.mxu0
      %2492 = vmatprep.mubr.f32.mxu0 0.0
      %2493 = vmatmul.mubr.f32.gmra.mxu0 %v2359
      %v2494 = vpop.f32.mrf.mxu0
      %v2495 = vadd.f32 0.0, %v2494
      %v2496 = vpop.f32.mrf.mxu0
      %2497 = vmatprep.mubr.f32.mxu0 0.0
      %2498 = vmatmul.mubr.f32.gmra.mxu0 %v2362
      %v2499 = vpop.f32.mrf.mxu0
      %v2500 = vadd.f32 0.0, %v2499
      %v2501 = vpop.f32.mrf.mxu0
      %2502 = vmatprep.mubr.f32.mxu0 0.0
      %2503 = vmatmul.mubr.f32.gmra.mxu0 %v2365
      %v2504 = vpop.f32.mrf.mxu0
      %v2505 = vadd.f32 0.0, %v2504
      %v2506 = vpop.f32.mrf.mxu0
      %2507 = vmatprep.mubr.f32.mxu0 0.0
      %2508 = vmatmul.mubr.f32.gmra.mxu0 %v2368
      %v2509 = vpop.f32.mrf.mxu0
      %v2510 = vadd.f32 0.0, %v2509
      %v2511 = vpop.f32.mrf.mxu0
      %2512 = vmatprep.mubr.f32.mxu0 0.0
      %2513 = vmatmul.mubr.f32.gmra.mxu0 %v2371
      %v2514 = vpop.f32.mrf.mxu0
      %v2515 = vadd.f32 0.0, %v2514
      %v2516 = vpop.f32.mrf.mxu0
      %2517 = vdwg.mxu0
      %v2519 = vsel %vm466, %v2253, 0
      %v2522 = vsel %vm466, %v2254, 0
      %v2525 = vsel %vm466, %v2255, 0
      %v2528 = vsel %vm466, %v2256, 0
      %v2531 = vsel %vm466, %v2257, 0
      %v2534 = vsel %vm466, %v2258, 0
      %v2537 = vsel %vm466, %v2259, 0
      %v2540 = vsel %vm466, %v2260, 0
      %v2543 = vsel %vm466, %v2261, 0
      %v2546 = vsel %vm466, %v2262, 0
      %v2549 = vsel %vm466, %v2263, 0
      %v2552 = vsel %vm466, %v2264, 0
      %v2555 = vsel %vm466, %v2265, 0
      %v2558 = vsel %vm466, %v2266, 0
      %v2561 = vsel %vm466, %v2267, 0
      %v2564 = vsel %vm466, %v2268, 0
      %2566 = vmatprep.subr.mxu0 0.0
      %2567 = vmatpush1.msra.mxu0 0.0
      %2568 = vmatprep.subr.mxu0 0.0
      %2569 = vmatpush1.msra.mxu0 0.0
      %2570 = vmatprep.subr.mxu0 0.0
      %2571 = vmatpush1.msra.mxu0 0.0
      %2572 = vmatprep.subr.mxu0 0.0
      %2573 = vmatpush1.msra.mxu0 0.0
      %2574 = vmatprep.subr.mxu0 0.0
      %2575 = vmatpush1.msra.mxu0 0.0
      %2576 = vmatprep.subr.mxu0 0.0
      %2577 = vmatpush1.msra.mxu0 0.0
      %2578 = vmatprep.subr.mxu0 0.0
      %2579 = vmatpush1.msra.mxu0 0.0
      %2580 = vmatprep.subr.mxu0 0.0
      %2581 = vmatpush1.msra.mxu0 0.0
      %2582 = vmatprep.subr.mxu0 0.0
      %2583 = vmatpush1.msra.mxu0 0.0
      %2584 = vmatprep.subr.mxu0 0.0
      %2585 = vmatpush1.msra.mxu0 0.0
      %2586 = vmatprep.subr.mxu0 0.0
      %2587 = vmatpush1.msra.mxu0 0.0
      %2588 = vmatprep.subr.mxu0 0.0
      %2589 = vmatpush1.msra.mxu0 0.0
      %2590 = vmatprep.subr.mxu0 0.0
      %2591 = vmatpush1.msra.mxu0 0.0
      %2592 = vmatprep.subr.mxu0 0.0
      %2593 = vmatpush1.msra.mxu0 %v2320
      %2594 = vmatprep.subr.mxu0 0.0
      %2595 = vmatpush1.msra.mxu0 %v2319
      %2596 = vmatprep.subr.mxu0 0.0
      %2597 = vmatpush1.msra.mxu0 %v2318
      %2598 = vmatprep.subr.mxu0 0.0
      %2599 = vmatpush2.msra.mxu0 0.0
      %2600 = vmatprep.subr.mxu0 0.0
      %2601 = vmatpush2.msra.mxu0 0.0
      %2602 = vmatprep.subr.mxu0 0.0
      %2603 = vmatpush2.msra.mxu0 0.0
      %2604 = vmatprep.subr.mxu0 0.0
      %2605 = vmatpush2.msra.mxu0 0.0
      %2606 = vmatprep.subr.mxu0 0.0
      %2607 = vmatpush2.msra.mxu0 0.0
      %2608 = vmatprep.subr.mxu0 0.0
      %2609 = vmatpush2.msra.mxu0 0.0
      %2610 = vmatprep.subr.mxu0 0.0
      %2611 = vmatpush2.msra.mxu0 0.0
      %2612 = vmatprep.subr.mxu0 0.0
      %2613 = vmatpush2.msra.mxu0 0.0
      %2614 = vmatprep.subr.mxu0 0.0
      %2615 = vmatpush2.msra.mxu0 0.0
      %2616 = vmatprep.subr.mxu0 0.0
      %2617 = vmatpush2.msra.mxu0 0.0
      %2618 = vmatprep.subr.mxu0 0.0
      %2619 = vmatpush2.msra.mxu0 0.0
      %2620 = vmatprep.subr.mxu0 0.0
      %2621 = vmatpush2.msra.mxu0 0.0
      %2622 = vmatprep.subr.mxu0 0.0
      %2623 = vmatpush2.msra.mxu0 0.0
      %2624 = vmatprep.subr.mxu0 0.0
      %2625 = vmatpush2.msra.mxu0 0.0
      %2626 = vmatprep.subr.mxu0 0.0
      %2627 = vmatpush2.msra.mxu0 0.0
      %2628 = vmatprep.subr.mxu0 0.0
      %2629 = vmatpush2.msra.mxu0 0.0
      %2630 = vmatprep.mubr.f32.mxu0 0.0
      %2631 = vmatmul.mubr.f32.gmra.mxu0 %v2519
      %v2632 = vpop.f32.mrf.mxu0
      %v2633 = vadd.f32 %v2440, %v2632
      %v2634 = vpop.f32.mrf.mxu0
      %2635 = vmatprep.mubr.f32.mxu0 0.0
      %2636 = vmatmul.mubr.f32.gmra.mxu0 %v2522
      %v2637 = vpop.f32.mrf.mxu0
      %v2638 = vadd.f32 %v2445, %v2637
      %v2639 = vpop.f32.mrf.mxu0
      %2640 = vmatprep.mubr.f32.mxu0 0.0
      %2641 = vmatmul.mubr.f32.gmra.mxu0 %v2525
      %v2642 = vpop.f32.mrf.mxu0
      %v2643 = vadd.f32 %v2450, %v2642
      %v2644 = vpop.f32.mrf.mxu0
      %2645 = vmatprep.mubr.f32.mxu0 0.0
      %2646 = vmatmul.mubr.f32.gmra.mxu0 %v2528
      %v2647 = vpop.f32.mrf.mxu0
      %v2648 = vadd.f32 %v2455, %v2647
      %v2649 = vpop.f32.mrf.mxu0
      %2650 = vmatprep.mubr.f32.mxu0 0.0
      %2651 = vmatmul.mubr.f32.gmra.mxu0 %v2531
      %v2652 = vpop.f32.mrf.mxu0
      %v2653 = vadd.f32 %v2460, %v2652
      %v2654 = vpop.f32.mrf.mxu0
      %2655 = vmatprep.mubr.f32.mxu0 0.0
      %2656 = vmatmul.mubr.f32.gmra.mxu0 %v2534
      %v2657 = vpop.f32.mrf.mxu0
      %v2658 = vadd.f32 %v2465, %v2657
      %v2659 = vpop.f32.mrf.mxu0
      %2660 = vmatprep.mubr.f32.mxu0 0.0
      %2661 = vmatmul.mubr.f32.gmra.mxu0 %v2537
      %v2662 = vpop.f32.mrf.mxu0
      %v2663 = vadd.f32 %v2470, %v2662
      %v2664 = vpop.f32.mrf.mxu0
      %2665 = vmatprep.mubr.f32.mxu0 0.0
      %2666 = vmatmul.mubr.f32.gmra.mxu0 %v2540
      %v2667 = vpop.f32.mrf.mxu0
      %v2668 = vadd.f32 %v2475, %v2667
      %v2669 = vpop.f32.mrf.mxu0
      %2670 = vmatprep.mubr.f32.mxu0 0.0
      %2671 = vmatmul.mubr.f32.gmra.mxu0 %v2543
      %v2672 = vpop.f32.mrf.mxu0
      %v2673 = vadd.f32 %v2480, %v2672
      %v2674 = vpop.f32.mrf.mxu0
      %2675 = vmatprep.mubr.f32.mxu0 0.0
      %2676 = vmatmul.mubr.f32.gmra.mxu0 %v2546
      %v2677 = vpop.f32.mrf.mxu0
      %v2678 = vadd.f32 %v2485, %v2677
      %v2679 = vpop.f32.mrf.mxu0
      %2680 = vmatprep.mubr.f32.mxu0 0.0
      %2681 = vmatmul.mubr.f32.gmra.mxu0 %v2549
      %v2682 = vpop.f32.mrf.mxu0
      %v2683 = vadd.f32 %v2490, %v2682
      %v2684 = vpop.f32.mrf.mxu0
      %2685 = vmatprep.mubr.f32.mxu0 0.0
      %2686 = vmatmul.mubr.f32.gmra.mxu0 %v2552
      %v2687 = vpop.f32.mrf.mxu0
      %v2688 = vadd.f32 %v2495, %v2687
      %v2689 = vpop.f32.mrf.mxu0
      %2690 = vmatprep.mubr.f32.mxu0 0.0
      %2691 = vmatmul.mubr.f32.gmra.mxu0 %v2555
      %v2692 = vpop.f32.mrf.mxu0
      %v2693 = vadd.f32 %v2500, %v2692
      %v2694 = vpop.f32.mrf.mxu0
      %2695 = vmatprep.mubr.f32.mxu0 0.0
      %2696 = vmatmul.mubr.f32.gmra.mxu0 %v2558
      %v2697 = vpop.f32.mrf.mxu0
      %v2698 = vadd.f32 %v2505, %v2697
      %v2699 = vpop.f32.mrf.mxu0
      %2700 = vmatprep.mubr.f32.mxu0 0.0
      %2701 = vmatmul.mubr.f32.gmra.mxu0 %v2561
      %v2702 = vpop.f32.mrf.mxu0
      %v2703 = vadd.f32 %v2510, %v2702
      %v2704 = vpop.f32.mrf.mxu0
      %2705 = vmatprep.mubr.f32.mxu0 0.0
      %2706 = vmatmul.mubr.f32.gmra.mxu0 %v2564
      %v2707 = vpop.f32.mrf.mxu0
      %v2708 = vadd.f32 %v2515, %v2707
      %v2709 = vpop.f32.mrf.mxu0
      %2710 = vdwg.mxu0
      %s2711 = scalar_lea.vmem %s2, 192
      %v2712 = vld [vmem:[%s2711] sm:$0xff]
      %v2713 = vld [vmem:[%s2711 + $0x8] sm:$0xff]
      %v2714 = vld [vmem:[%s2711 + $0x10] sm:$0xff]
      %v2716 = vsel %vm466, %v2301, 0
      %v2719 = vsel %vm466, %v2302, 0
      %v2722 = vsel %vm466, %v2303, 0
      %v2725 = vsel %vm466, %v2304, 0
      %v2728 = vsel %vm466, %v2305, 0
      %v2731 = vsel %vm466, %v2306, 0
      %v2734 = vsel %vm466, %v2307, 0
      %v2737 = vsel %vm466, %v2308, 0
      %v2740 = vsel %vm466, %v2309, 0
      %v2743 = vsel %vm466, %v2310, 0
      %v2746 = vsel %vm466, %v2311, 0
      %v2749 = vsel %vm466, %v2312, 0
      %v2752 = vsel %vm466, %v2313, 0
      %v2755 = vsel %vm466, %v2314, 0
      %v2758 = vsel %vm466, %v2315, 0
      %v2761 = vsel %vm466, %v2316, 0
      %2763 = vmatprep.subr.mxu0 0.0
      %2764 = vmatpush1.msra.mxu0 0.0
      %2765 = vmatprep.subr.mxu0 0.0
      %2766 = vmatpush1.msra.mxu0 0.0
      %2767 = vmatprep.subr.mxu0 0.0
      %2768 = vmatpush1.msra.mxu0 0.0
      %2769 = vmatprep.subr.mxu0 0.0
      %2770 = vmatpush1.msra.mxu0 0.0
      %2771 = vmatprep.subr.mxu0 0.0
      %2772 = vmatpush1.msra.mxu0 0.0
      %2773 = vmatprep.subr.mxu0 0.0
      %2774 = vmatpush1.msra.mxu0 0.0
      %2775 = vmatprep.subr.mxu0 0.0
      %2776 = vmatpush1.msra.mxu0 0.0
      %2777 = vmatprep.subr.mxu0 0.0
      %2778 = vmatpush1.msra.mxu0 0.0
      %2779 = vmatprep.subr.mxu0 0.0
      %2780 = vmatpush1.msra.mxu0 0.0
      %2781 = vmatprep.subr.mxu0 0.0
      %2782 = vmatpush1.msra.mxu0 0.0
      %2783 = vmatprep.subr.mxu0 0.0
      %2784 = vmatpush1.msra.mxu0 0.0
      %2785 = vmatprep.subr.mxu0 0.0
      %2786 = vmatpush1.msra.mxu0 0.0
      %2787 = vmatprep.subr.mxu0 0.0
      %2788 = vmatpush1.msra.mxu0 0.0
      %2789 = vmatprep.subr.mxu0 0.0
      %2790 = vmatpush1.msra.mxu0 %v2714
      %2791 = vmatprep.subr.mxu0 0.0
      %2792 = vmatpush1.msra.mxu0 %v2713
      %2793 = vmatprep.subr.mxu0 0.0
      %2794 = vmatpush1.msra.mxu0 %v2712
      %2795 = vmatprep.subr.mxu0 0.0
      %2796 = vmatpush2.msra.mxu0 0.0
      %2797 = vmatprep.subr.mxu0 0.0
      %2798 = vmatpush2.msra.mxu0 0.0
      %2799 = vmatprep.subr.mxu0 0.0
      %2800 = vmatpush2.msra.mxu0 0.0
      %2801 = vmatprep.subr.mxu0 0.0
      %2802 = vmatpush2.msra.mxu0 0.0
      %2803 = vmatprep.subr.mxu0 0.0
      %2804 = vmatpush2.msra.mxu0 0.0
      %2805 = vmatprep.subr.mxu0 0.0
      %2806 = vmatpush2.msra.mxu0 0.0
      %2807 = vmatprep.subr.mxu0 0.0
      %2808 = vmatpush2.msra.mxu0 0.0
      %2809 = vmatprep.subr.mxu0 0.0
      %2810 = vmatpush2.msra.mxu0 0.0
      %2811 = vmatprep.subr.mxu0 0.0
      %2812 = vmatpush2.msra.mxu0 0.0
      %2813 = vmatprep.subr.mxu0 0.0
      %2814 = vmatpush2.msra.mxu0 0.0
      %2815 = vmatprep.subr.mxu0 0.0
      %2816 = vmatpush2.msra.mxu0 0.0
      %2817 = vmatprep.subr.mxu0 0.0
      %2818 = vmatpush2.msra.mxu0 0.0
      %2819 = vmatprep.subr.mxu0 0.0
      %2820 = vmatpush2.msra.mxu0 0.0
      %2821 = vmatprep.subr.mxu0 0.0
      %2822 = vmatpush2.msra.mxu0 0.0
      %2823 = vmatprep.subr.mxu0 0.0
      %2824 = vmatpush2.msra.mxu0 0.0
      %2825 = vmatprep.subr.mxu0 0.0
      %2826 = vmatpush2.msra.mxu0 0.0
      %2827 = vmatprep.mubr.f32.mxu0 0.0
      %2828 = vmatmul.mubr.f32.gmra.mxu0 %v2716
      %v2829 = vpop.f32.mrf.mxu0
      %v2830 = vadd.f32 0.0, %v2829
      %v2831 = vpop.f32.mrf.mxu0
      %2832 = vmatprep.mubr.f32.mxu0 0.0
      %2833 = vmatmul.mubr.f32.gmra.mxu0 %v2719
      %v2834 = vpop.f32.mrf.mxu0
      %v2835 = vadd.f32 0.0, %v2834
      %v2836 = vpop.f32.mrf.mxu0
      %2837 = vmatprep.mubr.f32.mxu0 0.0
      %2838 = vmatmul.mubr.f32.gmra.mxu0 %v2722
      %v2839 = vpop.f32.mrf.mxu0
      %v2840 = vadd.f32 0.0, %v2839
      %v2841 = vpop.f32.mrf.mxu0
      %2842 = vmatprep.mubr.f32.mxu0 0.0
      %2843 = vmatmul.mubr.f32.gmra.mxu0 %v2725
      %v2844 = vpop.f32.mrf.mxu0
      %v2845 = vadd.f32 0.0, %v2844
      %v2846 = vpop.f32.mrf.mxu0
      %2847 = vmatprep.mubr.f32.mxu0 0.0
      %2848 = vmatmul.mubr.f32.gmra.mxu0 %v2728
      %v2849 = vpop.f32.mrf.mxu0
      %v2850 = vadd.f32 0.0, %v2849
      %v2851 = vpop.f32.mrf.mxu0
      %2852 = vmatprep.mubr.f32.mxu0 0.0
      %2853 = vmatmul.mubr.f32.gmra.mxu0 %v2731
      %v2854 = vpop.f32.mrf.mxu0
      %v2855 = vadd.f32 0.0, %v2854
      %v2856 = vpop.f32.mrf.mxu0
      %2857 = vmatprep.mubr.f32.mxu0 0.0
      %2858 = vmatmul.mubr.f32.gmra.mxu0 %v2734
      %v2859 = vpop.f32.mrf.mxu0
      %v2860 = vadd.f32 0.0, %v2859
      %v2861 = vpop.f32.mrf.mxu0
      %2862 = vmatprep.mubr.f32.mxu0 0.0
      %2863 = vmatmul.mubr.f32.gmra.mxu0 %v2737
      %v2864 = vpop.f32.mrf.mxu0
      %v2865 = vadd.f32 0.0, %v2864
      %v2866 = vpop.f32.mrf.mxu0
      %2867 = vmatprep.mubr.f32.mxu0 0.0
      %2868 = vmatmul.mubr.f32.gmra.mxu0 %v2740
      %v2869 = vpop.f32.mrf.mxu0
      %v2870 = vadd.f32 0.0, %v2869
      %v2871 = vpop.f32.mrf.mxu0
      %2872 = vmatprep.mubr.f32.mxu0 0.0
      %2873 = vmatmul.mubr.f32.gmra.mxu0 %v2743
      %v2874 = vpop.f32.mrf.mxu0
      %v2875 = vadd.f32 0.0, %v2874
      %v2876 = vpop.f32.mrf.mxu0
      %2877 = vmatprep.mubr.f32.mxu0 0.0
      %2878 = vmatmul.mubr.f32.gmra.mxu0 %v2746
      %v2879 = vpop.f32.mrf.mxu0
      %v2880 = vadd.f32 0.0, %v2879
      %v2881 = vpop.f32.mrf.mxu0
      %2882 = vmatprep.mubr.f32.mxu0 0.0
      %2883 = vmatmul.mubr.f32.gmra.mxu0 %v2749
      %v2884 = vpop.f32.mrf.mxu0
      %v2885 = vadd.f32 0.0, %v2884
      %v2886 = vpop.f32.mrf.mxu0
      %2887 = vmatprep.mubr.f32.mxu0 0.0
      %2888 = vmatmul.mubr.f32.gmra.mxu0 %v2752
      %v2889 = vpop.f32.mrf.mxu0
      %v2890 = vadd.f32 0.0, %v2889
      %v2891 = vpop.f32.mrf.mxu0
      %2892 = vmatprep.mubr.f32.mxu0 0.0
      %2893 = vmatmul.mubr.f32.gmra.mxu0 %v2755
      %v2894 = vpop.f32.mrf.mxu0
      %v2895 = vadd.f32 0.0, %v2894
      %v2896 = vpop.f32.mrf.mxu0
      %2897 = vmatprep.mubr.f32.mxu0 0.0
      %2898 = vmatmul.mubr.f32.gmra.mxu0 %v2758
      %v2899 = vpop.f32.mrf.mxu0
      %v2900 = vadd.f32 0.0, %v2899
      %v2901 = vpop.f32.mrf.mxu0
      %2902 = vmatprep.mubr.f32.mxu0 0.0
      %2903 = vmatmul.mubr.f32.gmra.mxu0 %v2761
      %v2904 = vpop.f32.mrf.mxu0
      %v2905 = vadd.f32 0.0, %v2904
      %v2906 = vpop.f32.mrf.mxu0
      %2907 = vdwg.mxu0
      %v2908 = vadd.f32 %v2633, %v2830
      %v2909 = vadd.f32 %v2638, %v2835
      %v2910 = vadd.f32 %v2643, %v2840
      %v2911 = vadd.f32 %v2648, %v2845
      %v2912 = vadd.f32 %v2653, %v2850
      %v2913 = vadd.f32 %v2658, %v2855
      %v2914 = vadd.f32 %v2663, %v2860
      %v2915 = vadd.f32 %v2668, %v2865
      %v2916 = vadd.f32 %v2673, %v2870
      %v2917 = vadd.f32 %v2678, %v2875
      %v2918 = vadd.f32 %v2683, %v2880
      %v2919 = vadd.f32 %v2688, %v2885
      %v2920 = vadd.f32 %v2693, %v2890
      %v2921 = vadd.f32 %v2698, %v2895
      %v2922 = vadd.f32 %v2703, %v2900
      %v2923 = vadd.f32 %v2708, %v2905
      %v2924 = vld [vmem:[%s3 + $0x3] sm:$0x1]
      %v2925 = vlaneseq
      %v2926 = vshrl.u32 %v2925, 7
      %v2927 = vsub.s32 0, %v2926
      %v2928 = vrot.slane %v2924, %v2927
      %v2929 = vadd.f32 %v2908, %v2928
      %v2930 = vadd.f32 %v2909, %v2928
      %v2931 = vadd.f32 %v2910, %v2928
      %v2932 = vadd.f32 %v2911, %v2928
      %v2933 = vadd.f32 %v2912, %v2928
      %v2934 = vadd.f32 %v2913, %v2928
      %v2935 = vadd.f32 %v2914, %v2928
      %v2936 = vadd.f32 %v2915, %v2928
      %v2937 = vadd.f32 %v2916, %v2928
      %v2938 = vadd.f32 %v2917, %v2928
      %v2939 = vadd.f32 %v2918, %v2928
      %v2940 = vadd.f32 %v2919, %v2928
      %v2941 = vadd.f32 %v2920, %v2928
      %v2942 = vadd.f32 %v2921, %v2928
      %v2943 = vadd.f32 %v2922, %v2928
      %v2944 = vadd.f32 %v2923, %v2928
      %v2945 = vadd.f32 %v2929, %v201
      %v2946 = vadd.f32 %v2930, %v202
      %v2947 = vadd.f32 %v2931, %v203
      %v2948 = vadd.f32 %v2932, %v204
      %v2949 = vadd.f32 %v2933, %v205
      %v2950 = vadd.f32 %v2934, %v206
      %v2951 = vadd.f32 %v2935, %v207
      %v2952 = vadd.f32 %v2936, %v208
      %v2953 = vadd.f32 %v2937, %v209
      %v2954 = vadd.f32 %v2938, %v210
      %v2955 = vadd.f32 %v2939, %v211
      %v2956 = vadd.f32 %v2940, %v212
      %v2957 = vadd.f32 %v2941, %v213
      %v2958 = vadd.f32 %v2942, %v214
      %v2959 = vadd.f32 %v2943, %v215
      %v2960 = vadd.f32 %v2944, %v216
      %v2961 = vmax.f32 %v2945, 0.0
      %v2962 = vmax.f32 %v2946, 0.0
      %v2963 = vmax.f32 %v2947, 0.0
      %v2964 = vmax.f32 %v2948, 0.0
      %v2965 = vmax.f32 %v2949, 0.0
      %v2966 = vmax.f32 %v2950, 0.0
      %v2967 = vmax.f32 %v2951, 0.0
      %v2968 = vmax.f32 %v2952, 0.0
      %v2969 = vmax.f32 %v2953, 0.0
      %v2970 = vmax.f32 %v2954, 0.0
      %v2971 = vmax.f32 %v2955, 0.0
      %v2972 = vmax.f32 %v2956, 0.0
      %v2973 = vmax.f32 %v2957, 0.0
      %v2974 = vmax.f32 %v2958, 0.0
      %v2975 = vmax.f32 %v2959, 0.0
      %v2976 = vmax.f32 %v2960, 0.0
      %2977 = vst.msk [vmem:[%s199] sm:$0xff] %vm466, %v2961
      %2978 = vst.msk [vmem:[%s199 + $0x8] sm:$0xff] %vm466, %v2962
      %2979 = vst.msk [vmem:[%s199 + $0x10] sm:$0xff] %vm466, %v2963
      %2980 = vst.msk [vmem:[%s199 + $0x18] sm:$0xff] %vm466, %v2964
      %2981 = vst.msk [vmem:[%s199 + $0x20] sm:$0xff] %vm466, %v2965
      %2982 = vst.msk [vmem:[%s199 + $0x28] sm:$0xff] %vm466, %v2966
      %2983 = vst.msk [vmem:[%s199 + $0x30] sm:$0xff] %vm466, %v2967
      %2984 = vst.msk [vmem:[%s199 + $0x38] sm:$0xff] %vm466, %v2968
      %2985 = vst.msk [vmem:[%s199 + $0x40] sm:$0xff] %vm466, %v2969
      %2986 = vst.msk [vmem:[%s199 + $0x48] sm:$0xff] %vm466, %v2970
      %2987 = vst.msk [vmem:[%s199 + $0x50] sm:$0xff] %vm466, %v2971
      %2988 = vst.msk [vmem:[%s199 + $0x58] sm:$0xff] %vm466, %v2972
      %2989 = vst.msk [vmem:[%s199 + $0x60] sm:$0xff] %vm466, %v2973
      %2990 = vst.msk [vmem:[%s199 + $0x68] sm:$0xff] %vm466, %v2974
      %2991 = vst.msk [vmem:[%s199 + $0x70] sm:$0xff] %vm466, %v2975
      %2992 = vst.msk [vmem:[%s199 + $0x78] sm:$0xff] %vm466, %v2976
      %s2993 = smul.u32 16, %s15
      %p2994 = scmp.lt.s32.totalorder %s2993, 63
      %s2995 = scalar_select %p2994, %s2993, 63
      %s2996 = smul.addr %s2995, 8
      %s2997 = scalar_lea.vmem %s4, %s2996
      // Predicated region
      $region37: #{tpu_custom_call.1} parent=35 // pred_check
        %p2998 = pneg %p122
      $region38: #{tpu_custom_call.1} parent=35 // pred_check_branch
        %3000 = sbr.rel (%p2998) target = $region40
      $region39: #{tpu_custom_call.1} parent=35 // pred_region
        %s3001 = smul.u32 16, %s15
      $region40: #{tpu_custom_call.1} parent=35 // pred_fallthru
        _
    $region36: #{tpu_custom_call.1} parent=5 // pred_fallthru
      _
    %p3002 = scmp.le.s32.totalorder 2, %s10
    // Predicated region
    $region41: #{tpu_custom_call.1} parent=5 // pred_check
      %p3003 = pneg %p3002
    $region42: #{tpu_custom_call.1} parent=5 // pred_check_branch
      %3005 = sbr.rel (%p3003) target = $region44
    $region43: #{tpu_custom_call.1} parent=5 // pred_region
      %s3006 = ssub.s32 %s10, 2
      // Predicated region
      $region45: #{tpu_custom_call.1} parent=43 // pred_check
        %p3007 = pneg %p128
      $region46: #{tpu_custom_call.1} parent=43 // pred_check_branch
        %3009 = sbr.rel (%p3007) target = $region48
      $region47: #{tpu_custom_call.1} parent=43 // pred_region
        %s3010 = smul.u32 16, %s16
        %p3011 = scmp.lt.s32.totalorder %s3010, 63
        %s3012 = scalar_select %p3011, %s3010, 63
        %s3013 = smul.addr %s3012, 8
        %s3014 = scalar_lea.vmem %s4, %s3013
      $region48: #{tpu_custom_call.1} parent=43 // pred_fallthru
        _
    $region44: #{tpu_custom_call.1} parent=5 // pred_fallthru
      _
  $region6: #{tpu_custom_call.1} parent=0 // loop_footer
    %s14 = sadd.s32 1, %s10
  $region7: #{tpu_custom_call.1} parent=0 // loop_footer_branch
    %9 = sbr.rel target = $region3
  $region8: #{tpu_custom_call.1} parent=0 // loop_exit
    _

</llo_original>
